<compile_context>
chip_gen: v6e
topology: v6e:2x2x1
jax: 0.10.0
libtpu: 0.0.40
codegen_flags: <defaults>
</compile_context>

<pallas_src>
import functools

import jax
import jax.numpy as jnp
from jax import lax
from jax.experimental import pallas as pl
from jax.experimental.pallas import tpu as pltpu


@functools.partial(jax.jit, static_argnames=("stride", "padding", "groups", "eps"))
def bn_act_conv2d(x_nchw, bn_gamma, bn_beta, bn_mean, bn_var, conv_w,
                  *, stride=1, padding=0, groups=1, eps=1e-3):
    """x_nchw: (N, Cin, H, W); conv_w: (Cout, Cin//groups, KH, KW) -> (N, Cout, OH, OW)."""
    N, Cin, H, W = x_nchw.shape
    Cout, Cg, KH, KW = conv_w.shape
    G = groups
    assert Cin % G == 0 and Cout % G == 0 and Cg == Cin // G
    Coutg = Cout // G
    s, p = stride, padding
    Hp, Wp = H + 2 * p, W + 2 * p
    OH = (Hp - KH) // s + 1
    OW = (Wp - KW) // s + 1

    # ---- fold BN (eval mode) into per-channel scale/shift (f32) --------------
    scale = (bn_gamma.astype(jnp.float32) /
             jnp.sqrt(bn_var.astype(jnp.float32) + eps))
    shift = bn_beta.astype(jnp.float32) - bn_mean.astype(jnp.float32) * scale
    scale_g = scale.reshape(G, 1, Cg)
    shift_g = shift.reshape(G, 1, Cg)

    # ---- boundary relayout: NCHW -> (G, N, Hp, Wp, Cg), zero-padded ----------
    xg = x_nchw.astype(jnp.float32).reshape(N, G, Cg, H, W).transpose(1, 0, 3, 4, 2)
    if p > 0:
        xg = jnp.pad(xg, ((0, 0), (0, 0), (p, p), (p, p), (0, 0)))

    # ---- weights: (Cout, Cg, KH, KW) -> (G, KH*KW, Cg, Coutg) in bf16 --------
    wg = (conv_w.astype(jnp.float32)
          .reshape(G, Coutg, Cg, KH, KW)
          .transpose(0, 3, 4, 2, 1)
          .reshape(G, KH * KW, Cg, Coutg)
          .astype(jnp.bfloat16))

    def kernel(x_ref, scale_ref, shift_ref, w_ref, o_ref):
        # x_ref: (1, 1, Hp, Wp, Cg) raw zero-padded input slab (f32)
        x = x_ref[0, 0]                                           # (Hp, Wp, Cg)
        # fused BN (scale/shift) + ReLU in f32 on the freshly-landed tile
        act = jnp.maximum(x * scale_ref[...] + shift_ref[...], 0.0)
        if p > 0:
            # zero padding must stay zero AFTER BN+ReLU -> re-zero the border
            row = lax.broadcasted_iota(jnp.int32, (Hp, Wp, Cg), 0)
            col = lax.broadcasted_iota(jnp.int32, (Hp, Wp, Cg), 1)
            interior = ((row >= p) & (row < Hp - p) &
                        (col >= p) & (col < Wp - p))
            act = jnp.where(interior, act, 0.0)

        # accumulate KH*KW shifted matmuls on the MXU (bf16 in, f32 accumulate)
        acc = jnp.zeros((OH * OW, Coutg), jnp.float32)
        for i in range(KH):
            for j in range(KW):
                a = lax.slice(act, (i, j, 0),
                              (i + s * (OH - 1) + 1, j + s * (OW - 1) + 1, Cg),
                              (s, s, 1))                          # (OH, OW, Cg)
                a = a.reshape(OH * OW, Cg).astype(jnp.bfloat16)
                acc = acc + jnp.dot(a, w_ref[0, i * KW + j],
                                    preferred_element_type=jnp.float32)
        o_ref[0, 0] = acc

    flops = 2 * G * N * OH * OW * Coutg * KH * KW * Cg
    bytes_accessed = (xg.size * 4 + wg.size * 2 + 2 * G * Cg * 4
                      + G * N * OH * OW * Coutg * 4)

    out = pl.pallas_call(
        kernel,
        out_shape=jax.ShapeDtypeStruct((G, N, OH * OW, Coutg), jnp.float32),
        grid=(G, N),
        in_specs=[
            pl.BlockSpec((1, 1, Hp, Wp, Cg), lambda g, n: (g, n, 0, 0, 0)),
            pl.BlockSpec((1, 1, Cg), lambda g, n: (g, 0, 0)),
            pl.BlockSpec((1, 1, Cg), lambda g, n: (g, 0, 0)),
            pl.BlockSpec((1, KH * KW, Cg, Coutg), lambda g, n: (g, 0, 0, 0)),
        ],
        out_specs=pl.BlockSpec((1, 1, OH * OW, Coutg), lambda g, n: (g, n, 0, 0)),
        compiler_params=pltpu.CompilerParams(
            dimension_semantics=("parallel", "parallel"),
            vmem_limit_bytes=48 * 1024 * 1024,
        ),
        cost_estimate=pl.CostEstimate(flops=flops, transcendentals=0,
                                      bytes_accessed=bytes_accessed),
    )(xg, scale_g, shift_g, wg)

    # (G, N, OH*OW, Coutg) -> NCHW
    out = out.reshape(G, N, OH, OW, Coutg).transpose(1, 0, 4, 2, 3)
    return out.reshape(N, Cout, OH, OW)


# ----------------------------------------------------------------------------
# Reference (pure JAX / XLA) for verification.
# ----------------------------------------------------------------------------
def reference(x_nchw, bn_gamma, bn_beta, bn_mean, bn_var, conv_w,
              *, stride, padding, groups, eps=1e-3):
    sc = (bn_gamma / jnp.sqrt(bn_var + eps)).reshape(1, -1, 1, 1)
    sh = (bn_beta - bn_mean * bn_gamma / jnp.sqrt(bn_var + eps)).reshape(1, -1, 1, 1)
    a = jnp.maximum(x_nchw * sc + sh, 0.0)
    return jax.lax.conv_general_dilated(
        a, conv_w, window_strides=(stride, stride),
        padding=[(padding, padding), (padding, padding)],
        feature_group_count=groups,
        dimension_numbers=("NCHW", "OIHW", "NCHW"),
    )


if __name__ == "__main__":
    # Config 1 (matches the module's typical grouped 3x3 use):
    #   in_chs=4, out_chs=8, 3x3, stride=1, padding=1, groups=2.
    N, Cin, H, W = 2, 4, 16, 16
    Cout, KH, KW = 8, 3, 3
    stride, padding, groups = 1, 1, 2

    key = jax.random.PRNGKey(0)
    kx, kg, kb, km, kv, kw, kw2 = jax.random.split(key, 7)

    x = jax.random.normal(kx, (N, Cin, H, W), dtype=jnp.float32)
    bn_gamma = jax.random.uniform(kg, (Cin,), minval=0.5, maxval=1.5)
    bn_beta = jax.random.normal(kb, (Cin,)) * 0.1
    bn_mean = jax.random.normal(km, (Cin,)) * 0.1
    bn_var = jax.random.uniform(kv, (Cin,), minval=0.5, maxval=1.5)
    conv_w = jax.random.normal(kw, (Cout, Cin // groups, KH, KW)) * 0.1

    out = bn_act_conv2d(x, bn_gamma, bn_beta, bn_mean, bn_var, conv_w,
                        stride=stride, padding=padding, groups=groups)
    out = jax.block_until_ready(out)
    ref = reference(x, bn_gamma, bn_beta, bn_mean, bn_var, conv_w,
                    stride=stride, padding=padding, groups=groups)
    assert out.shape == ref.shape == (N, Cout, H, W), (out.shape, ref.shape)
    # bf16 MXU inputs with f32 accumulation -> slightly looser tolerance.
    assert jnp.allclose(out, ref, atol=2e-2, rtol=2e-2), \
        float(jnp.max(jnp.abs(out - ref)))

    # Config 2: 1x1 conv, no groups, no padding (exercises p=0 / G=1 path).
    Cout2 = 16
    conv_w2 = jax.random.normal(kw2, (Cout2, Cin, 1, 1)) * 0.1
    out2 = bn_act_conv2d(x, bn_gamma, bn_beta, bn_mean, bn_var, conv_w2,
                         stride=1, padding=0, groups=1)
    out2 = jax.block_until_ready(out2)
    ref2 = reference(x, bn_gamma, bn_beta, bn_mean, bn_var, conv_w2,
                     stride=1, padding=0, groups=1)
    assert out2.shape == ref2.shape == (N, Cout2, H, W), (out2.shape, ref2.shape)
    assert jnp.allclose(out2, ref2, atol=2e-2, rtol=2e-2), \
        float(jnp.max(jnp.abs(out2 - ref2)))

    print("KERNEL_OK")
</pallas_src>

<mosaic_0001>
module attributes {stable_mosaic.version = 11 : i64} {
  func.func @kernel(%arg0: i32, %arg1: i32, %arg2: memref<1x1x18x18x2xf32, #tpu.memory_space<vmem>>, %arg3: memref<1x1x2xf32, #tpu.memory_space<vmem>>, %arg4: memref<1x1x2xf32, #tpu.memory_space<vmem>>, %arg5: memref<1x9x2x4xbf16, #tpu.memory_space<vmem>>, %arg6: memref<1x1x256x4xf32, #tpu.memory_space<vmem>>) attributes {dimension_semantics = [#tpu.dimension_semantics<parallel>, #tpu.dimension_semantics<parallel>], iteration_bounds = array<i64: 2, 2>, scalar_prefetch = 0 : i64, scratch_operands = 0 : i64, tpu.core_type = #tpu.core_type<tc>, window_params = [{transform_indices = @transform_0, window_bounds = array<i64: 1, 1, 18, 18, 2>}, {transform_indices = @transform_1, window_bounds = array<i64: 1, 1, 2>}, {transform_indices = @transform_2, window_bounds = array<i64: 1, 1, 2>}, {transform_indices = @transform_3, window_bounds = array<i64: 1, 9, 2, 4>}, {transform_indices = @transform_4, window_bounds = array<i64: 1, 1, 256, 4>}]} {
    %c0 = arith.constant 0 : index
    %c0_0 = arith.constant 0 : index
    %c0_1 = arith.constant 0 : index
    %c0_2 = arith.constant 0 : index
    %c0_3 = arith.constant 0 : index
    %0 = vector.load %arg2[%c0, %c0_0, %c0_1, %c0_2, %c0_3] : memref<1x1x18x18x2xf32, #tpu.memory_space<vmem>>, vector<1x1x18x18x2xf32>
    %1 = vector.shape_cast %0 : vector<1x1x18x18x2xf32> to vector<18x18x2xf32>
    %c0_4 = arith.constant 0 : index
    %c0_5 = arith.constant 0 : index
    %c0_6 = arith.constant 0 : index
    %2 = vector.load %arg3[%c0_4, %c0_5, %c0_6] : memref<1x1x2xf32, #tpu.memory_space<vmem>>, vector<1x1x2xf32>
    %3 = vector.broadcast %2 : vector<1x1x2xf32> to vector<18x18x2xf32>
    %4 = arith.mulf %1, %3 : vector<18x18x2xf32>
    %c0_7 = arith.constant 0 : index
    %c0_8 = arith.constant 0 : index
    %c0_9 = arith.constant 0 : index
    %5 = vector.load %arg4[%c0_7, %c0_8, %c0_9] : memref<1x1x2xf32, #tpu.memory_space<vmem>>, vector<1x1x2xf32>
    %6 = vector.broadcast %5 : vector<1x1x2xf32> to vector<18x18x2xf32>
    %7 = arith.addf %4, %6 : vector<18x18x2xf32>
    %cst = arith.constant 0.000000e+00 : f32
    %8 = vector.broadcast %cst : f32 to vector<18x18x2xf32>
    %9 = arith.maximumf %7, %8 : vector<18x18x2xf32>
    %10 = tpu.iota {dimensions = array<i32: 0>} : vector<18x18x2xi32>
    %11 = tpu.iota {dimensions = array<i32: 1>} : vector<18x18x2xi32>
    %c1_i32 = arith.constant 1 : i32
    %12 = vector.broadcast %c1_i32 : i32 to vector<18x18x2xi32>
    %13 = arith.cmpi sge, %10, %12 : vector<18x18x2xi32>
    %c17_i32 = arith.constant 17 : i32
    %14 = vector.broadcast %c17_i32 : i32 to vector<18x18x2xi32>
    %15 = arith.cmpi slt, %10, %14 : vector<18x18x2xi32>
    %16 = arith.andi %13, %15 : vector<18x18x2xi1>
    %c1_i32_10 = arith.constant 1 : i32
    %17 = vector.broadcast %c1_i32_10 : i32 to vector<18x18x2xi32>
    %18 = arith.cmpi sge, %11, %17 : vector<18x18x2xi32>
    %19 = arith.andi %16, %18 : vector<18x18x2xi1>
    %c17_i32_11 = arith.constant 17 : i32
    %20 = vector.broadcast %c17_i32_11 : i32 to vector<18x18x2xi32>
    %21 = arith.cmpi slt, %11, %20 : vector<18x18x2xi32>
    %22 = arith.andi %19, %21 : vector<18x18x2xi1>
    %cst_12 = arith.constant 0.000000e+00 : f32
    %23 = vector.broadcast %cst_12 : f32 to vector<18x18x2xf32>
    %24 = arith.select %22, %9, %23 : vector<18x18x2xi1>, vector<18x18x2xf32>
    %cst_13 = arith.constant 0.000000e+00 : f32
    %25 = vector.broadcast %cst_13 : f32 to vector<256x4xf32>
    %26 = vector.extract_strided_slice %24 {offsets = [0, 0, 0], sizes = [16, 16, 2], strides = [1, 1, 1]} : vector<18x18x2xf32> to vector<16x16x2xf32>
    %27 = vector.shape_cast %26 : vector<16x16x2xf32> to vector<256x2xf32>
    %28 = arith.truncf %27 : vector<256x2xf32> to vector<256x2xbf16>
    %c0_14 = arith.constant 0 : index
    %c0_15 = arith.constant 0 : index
    %c0_16 = arith.constant 0 : index
    %c0_17 = arith.constant 0 : index
    %29 = vector.load %arg5[%c0_14, %c0_15, %c0_16, %c0_17] : memref<1x9x2x4xbf16, #tpu.memory_space<vmem>>, vector<1x1x2x4xbf16>
    %30 = vector.shape_cast %29 : vector<1x1x2x4xbf16> to vector<2x4xbf16>
    %cst_18 = arith.constant dense<0.000000e+00> : vector<256x4xf32>
    %31 = tpu.matmul %28, %30, %cst_18 {dimension_numbers = #tpu.dot_dimension_numbers<[1], [0], [0], [1], [0, 0, 1, 1], [], []>} : vector<256x2xbf16>, vector<2x4xbf16>, vector<256x4xf32> -> vector<256x4xf32>
    %32 = arith.addf %25, %31 : vector<256x4xf32>
    %33 = vector.extract_strided_slice %24 {offsets = [0, 1, 0], sizes = [16, 16, 2], strides = [1, 1, 1]} : vector<18x18x2xf32> to vector<16x16x2xf32>
    %34 = vector.shape_cast %33 : vector<16x16x2xf32> to vector<256x2xf32>
    %35 = arith.truncf %34 : vector<256x2xf32> to vector<256x2xbf16>
    %c0_19 = arith.constant 0 : index
    %c1 = arith.constant 1 : index
    %c0_20 = arith.constant 0 : index
    %c0_21 = arith.constant 0 : index
    %36 = vector.load %arg5[%c0_19, %c1, %c0_20, %c0_21] : memref<1x9x2x4xbf16, #tpu.memory_space<vmem>>, vector<1x1x2x4xbf16>
    %37 = vector.shape_cast %36 : vector<1x1x2x4xbf16> to vector<2x4xbf16>
    %cst_22 = arith.constant dense<0.000000e+00> : vector<256x4xf32>
    %38 = tpu.matmul %35, %37, %cst_22 {dimension_numbers = #tpu.dot_dimension_numbers<[1], [0], [0], [1], [0, 0, 1, 1], [], []>} : vector<256x2xbf16>, vector<2x4xbf16>, vector<256x4xf32> -> vector<256x4xf32>
    %39 = arith.addf %32, %38 : vector<256x4xf32>
    %40 = vector.extract_strided_slice %24 {offsets = [0, 2, 0], sizes = [16, 16, 2], strides = [1, 1, 1]} : vector<18x18x2xf32> to vector<16x16x2xf32>
    %41 = vector.shape_cast %40 : vector<16x16x2xf32> to vector<256x2xf32>
    %42 = arith.truncf %41 : vector<256x2xf32> to vector<256x2xbf16>
    %c0_23 = arith.constant 0 : index
    %c2 = arith.constant 2 : index
    %c0_24 = arith.constant 0 : index
    %c0_25 = arith.constant 0 : index
    %43 = vector.load %arg5[%c0_23, %c2, %c0_24, %c0_25] : memref<1x9x2x4xbf16, #tpu.memory_space<vmem>>, vector<1x1x2x4xbf16>
    %44 = vector.shape_cast %43 : vector<1x1x2x4xbf16> to vector<2x4xbf16>
    %cst_26 = arith.constant dense<0.000000e+00> : vector<256x4xf32>
    %45 = tpu.matmul %42, %44, %cst_26 {dimension_numbers = #tpu.dot_dimension_numbers<[1], [0], [0], [1], [0, 0, 1, 1], [], []>} : vector<256x2xbf16>, vector<2x4xbf16>, vector<256x4xf32> -> vector<256x4xf32>
    %46 = arith.addf %39, %45 : vector<256x4xf32>
    %47 = vector.extract_strided_slice %24 {offsets = [1, 0, 0], sizes = [16, 16, 2], strides = [1, 1, 1]} : vector<18x18x2xf32> to vector<16x16x2xf32>
    %48 = vector.shape_cast %47 : vector<16x16x2xf32> to vector<256x2xf32>
    %49 = arith.truncf %48 : vector<256x2xf32> to vector<256x2xbf16>
    %c0_27 = arith.constant 0 : index
    %c3 = arith.constant 3 : index
    %c0_28 = arith.constant 0 : index
    %c0_29 = arith.constant 0 : index
    %50 = vector.load %arg5[%c0_27, %c3, %c0_28, %c0_29] : memref<1x9x2x4xbf16, #tpu.memory_space<vmem>>, vector<1x1x2x4xbf16>
    %51 = vector.shape_cast %50 : vector<1x1x2x4xbf16> to vector<2x4xbf16>
    %cst_30 = arith.constant dense<0.000000e+00> : vector<256x4xf32>
    %52 = tpu.matmul %49, %51, %cst_30 {dimension_numbers = #tpu.dot_dimension_numbers<[1], [0], [0], [1], [0, 0, 1, 1], [], []>} : vector<256x2xbf16>, vector<2x4xbf16>, vector<256x4xf32> -> vector<256x4xf32>
    %53 = arith.addf %46, %52 : vector<256x4xf32>
    %54 = vector.extract_strided_slice %24 {offsets = [1, 1, 0], sizes = [16, 16, 2], strides = [1, 1, 1]} : vector<18x18x2xf32> to vector<16x16x2xf32>
    %55 = vector.shape_cast %54 : vector<16x16x2xf32> to vector<256x2xf32>
    %56 = arith.truncf %55 : vector<256x2xf32> to vector<256x2xbf16>
    %c0_31 = arith.constant 0 : index
    %c4 = arith.constant 4 : index
    %c0_32 = arith.constant 0 : index
    %c0_33 = arith.constant 0 : index
    %57 = vector.load %arg5[%c0_31, %c4, %c0_32, %c0_33] : memref<1x9x2x4xbf16, #tpu.memory_space<vmem>>, vector<1x1x2x4xbf16>
    %58 = vector.shape_cast %57 : vector<1x1x2x4xbf16> to vector<2x4xbf16>
    %cst_34 = arith.constant dense<0.000000e+00> : vector<256x4xf32>
    %59 = tpu.matmul %56, %58, %cst_34 {dimension_numbers = #tpu.dot_dimension_numbers<[1], [0], [0], [1], [0, 0, 1, 1], [], []>} : vector<256x2xbf16>, vector<2x4xbf16>, vector<256x4xf32> -> vector<256x4xf32>
    %60 = arith.addf %53, %59 : vector<256x4xf32>
    %61 = vector.extract_strided_slice %24 {offsets = [1, 2, 0], sizes = [16, 16, 2], strides = [1, 1, 1]} : vector<18x18x2xf32> to vector<16x16x2xf32>
    %62 = vector.shape_cast %61 : vector<16x16x2xf32> to vector<256x2xf32>
    %63 = arith.truncf %62 : vector<256x2xf32> to vector<256x2xbf16>
    %c0_35 = arith.constant 0 : index
    %c5 = arith.constant 5 : index
    %c0_36 = arith.constant 0 : index
    %c0_37 = arith.constant 0 : index
    %64 = vector.load %arg5[%c0_35, %c5, %c0_36, %c0_37] : memref<1x9x2x4xbf16, #tpu.memory_space<vmem>>, vector<1x1x2x4xbf16>
    %65 = vector.shape_cast %64 : vector<1x1x2x4xbf16> to vector<2x4xbf16>
    %cst_38 = arith.constant dense<0.000000e+00> : vector<256x4xf32>
    %66 = tpu.matmul %63, %65, %cst_38 {dimension_numbers = #tpu.dot_dimension_numbers<[1], [0], [0], [1], [0, 0, 1, 1], [], []>} : vector<256x2xbf16>, vector<2x4xbf16>, vector<256x4xf32> -> vector<256x4xf32>
    %67 = arith.addf %60, %66 : vector<256x4xf32>
    %68 = vector.extract_strided_slice %24 {offsets = [2, 0, 0], sizes = [16, 16, 2], strides = [1, 1, 1]} : vector<18x18x2xf32> to vector<16x16x2xf32>
    %69 = vector.shape_cast %68 : vector<16x16x2xf32> to vector<256x2xf32>
    %70 = arith.truncf %69 : vector<256x2xf32> to vector<256x2xbf16>
    %c0_39 = arith.constant 0 : index
    %c6 = arith.constant 6 : index
    %c0_40 = arith.constant 0 : index
    %c0_41 = arith.constant 0 : index
    %71 = vector.load %arg5[%c0_39, %c6, %c0_40, %c0_41] : memref<1x9x2x4xbf16, #tpu.memory_space<vmem>>, vector<1x1x2x4xbf16>
    %72 = vector.shape_cast %71 : vector<1x1x2x4xbf16> to vector<2x4xbf16>
    %cst_42 = arith.constant dense<0.000000e+00> : vector<256x4xf32>
    %73 = tpu.matmul %70, %72, %cst_42 {dimension_numbers = #tpu.dot_dimension_numbers<[1], [0], [0], [1], [0, 0, 1, 1], [], []>} : vector<256x2xbf16>, vector<2x4xbf16>, vector<256x4xf32> -> vector<256x4xf32>
    %74 = arith.addf %67, %73 : vector<256x4xf32>
    %75 = vector.extract_strided_slice %24 {offsets = [2, 1, 0], sizes = [16, 16, 2], strides = [1, 1, 1]} : vector<18x18x2xf32> to vector<16x16x2xf32>
    %76 = vector.shape_cast %75 : vector<16x16x2xf32> to vector<256x2xf32>
    %77 = arith.truncf %76 : vector<256x2xf32> to vector<256x2xbf16>
    %c0_43 = arith.constant 0 : index
    %c7 = arith.constant 7 : index
    %c0_44 = arith.constant 0 : index
    %c0_45 = arith.constant 0 : index
    %78 = vector.load %arg5[%c0_43, %c7, %c0_44, %c0_45] : memref<1x9x2x4xbf16, #tpu.memory_space<vmem>>, vector<1x1x2x4xbf16>
    %79 = vector.shape_cast %78 : vector<1x1x2x4xbf16> to vector<2x4xbf16>
    %cst_46 = arith.constant dense<0.000000e+00> : vector<256x4xf32>
    %80 = tpu.matmul %77, %79, %cst_46 {dimension_numbers = #tpu.dot_dimension_numbers<[1], [0], [0], [1], [0, 0, 1, 1], [], []>} : vector<256x2xbf16>, vector<2x4xbf16>, vector<256x4xf32> -> vector<256x4xf32>
    %81 = arith.addf %74, %80 : vector<256x4xf32>
    %82 = vector.extract_strided_slice %24 {offsets = [2, 2, 0], sizes = [16, 16, 2], strides = [1, 1, 1]} : vector<18x18x2xf32> to vector<16x16x2xf32>
    %83 = vector.shape_cast %82 : vector<16x16x2xf32> to vector<256x2xf32>
    %84 = arith.truncf %83 : vector<256x2xf32> to vector<256x2xbf16>
    %c0_47 = arith.constant 0 : index
    %c8 = arith.constant 8 : index
    %c0_48 = arith.constant 0 : index
    %c0_49 = arith.constant 0 : index
    %85 = vector.load %arg5[%c0_47, %c8, %c0_48, %c0_49] : memref<1x9x2x4xbf16, #tpu.memory_space<vmem>>, vector<1x1x2x4xbf16>
    %86 = vector.shape_cast %85 : vector<1x1x2x4xbf16> to vector<2x4xbf16>
    %cst_50 = arith.constant dense<0.000000e+00> : vector<256x4xf32>
    %87 = tpu.matmul %84, %86, %cst_50 {dimension_numbers = #tpu.dot_dimension_numbers<[1], [0], [0], [1], [0, 0, 1, 1], [], []>} : vector<256x2xbf16>, vector<2x4xbf16>, vector<256x4xf32> -> vector<256x4xf32>
    %88 = arith.addf %81, %87 : vector<256x4xf32>
    %c0_51 = arith.constant 0 : index
    %c0_52 = arith.constant 0 : index
    %c0_53 = arith.constant 0 : index
    %c0_54 = arith.constant 0 : index
    %89 = vector.load %arg6[%c0_51, %c0_52, %c0_53, %c0_54] : memref<1x1x256x4xf32, #tpu.memory_space<vmem>>, vector<1x1x256x4xf32>
    %90 = vector.shape_cast %89 : vector<1x1x256x4xf32> to vector<256x4xf32>
    %91 = vector.shape_cast %88 : vector<256x4xf32> to vector<1x1x256x4xf32>
    tpu.vector_store %arg6[%c0_51, %c0_52, %c0_53, %c0_54], %91 {strides = array<i32>} : memref<1x1x256x4xf32, #tpu.memory_space<vmem>>, vector<1x1x256x4xf32>,
    return
  }
  func.func @transform_0(%arg0: i32, %arg1: i32) -> (i32, i32, i32, i32, i32) {
    %c0_i32 = arith.constant 0 : i32
    %c0_i32_0 = arith.constant 0 : i32
    %c0_i32_1 = arith.constant 0 : i32
    %c0_i32_2 = arith.constant 0 : i32
    return %arg0, %arg1, %c0_i32, %c0_i32_0, %c0_i32_1 : i32, i32, i32, i32, i32
  }
  func.func @transform_1(%arg0: i32, %arg1: i32) -> (i32, i32, i32) {
    %c0_i32 = arith.constant 0 : i32
    %c0_i32_0 = arith.constant 0 : i32
    %c0_i32_1 = arith.constant 0 : i32
    return %arg0, %c0_i32, %c0_i32_0 : i32, i32, i32
  }
  func.func @transform_2(%arg0: i32, %arg1: i32) -> (i32, i32, i32) {
    %c0_i32 = arith.constant 0 : i32
    %c0_i32_0 = arith.constant 0 : i32
    %c0_i32_1 = arith.constant 0 : i32
    return %arg0, %c0_i32, %c0_i32_0 : i32, i32, i32
  }
  func.func @transform_3(%arg0: i32, %arg1: i32) -> (i32, i32, i32, i32) {
    %c0_i32 = arith.constant 0 : i32
    %c0_i32_0 = arith.constant 0 : i32
    %c0_i32_1 = arith.constant 0 : i32
    %c0_i32_2 = arith.constant 0 : i32
    return %arg0, %c0_i32, %c0_i32_0, %c0_i32_1 : i32, i32, i32, i32
  }
  func.func @transform_4(%arg0: i32, %arg1: i32) -> (i32, i32, i32, i32) {
    %c0_i32 = arith.constant 0 : i32
    %c0_i32_0 = arith.constant 0 : i32
    %c0_i32_1 = arith.constant 0 : i32
    return %arg0, %arg1, %c0_i32, %c0_i32_0 : i32, i32, i32, i32
  }
}

</mosaic_0001>

<llo_original>
// kernel: bn_act_conv2d.1
$region0: #{bn_act_conv2d.1}
  #allocation0 [shape = 'u32[]', space=smem, size = 0x4, offset = 0x4, fixed_abs, tag = 'smem constant byte address 0x4 - core index']
  #allocation1 [shape = 'u32[144,128]{1,0:T(1,128)}', space=vmem, size = 0x12000, scoped, tag = 'internal scratch']
  %s0 = inlined_call_operand.vmem [shape: f32[2,2,18,18,2], index: 0, kind: input, shape index: {}]
  %s1 = inlined_call_operand.vmem [shape: f32[2,1,2], index: 1, kind: input, shape index: {}]
  %s2 = inlined_call_operand.vmem [shape: f32[2,1,2], index: 2, kind: input, shape index: {}]
  %s3 = inlined_call_operand.vmem [shape: bf16[2,9,2,4], index: 3, kind: input, shape index: {}]
  %s4 = inlined_call_operand.vmem [shape: f32[2,2,256,4], index: 4, kind: output, shape index: {}]
  %s5 = sld [smem:[#allocation0]]
  $region49: #{bn_act_conv2d.1} parent=0
    _
  %s7 = ssub.s32 1, %s5
  %s8 = scalar_select 0, %s7, %s5
  loop: start=0, step=1, limit=6
  $region2: #{bn_act_conv2d.1} parent=0 // loop_pre_header
    _
  $region3: #{bn_act_conv2d.1} parent=0 // loop_header
    %s10 = sphi 0, %s14
    %p11 = scmp.ge.s32.totalorder %s10, 6
    %s17 = sphi 0, %s29
    %s18 = sphi 0, %s25
    %s19 = sphi 0, %s17
    %s20 = sphi 0, %s18
    %s21 = sphi 0, %s19
    %s22 = sphi 0, %s20
    %s34 = sphi 0, %s36
    %s37 = sphi 0, %s34
    %s38 = sphi 0, %s37
    %s54 = sphi 0, %s38
    %s60 = sphi 0, %s62
    %s63 = sphi 0, %s60
    %s64 = sphi 0, %s63
    %s80 = sphi 0, %s64
    %s86 = sphi 0, %s88
    %s89 = sphi 0, %s86
    %s90 = sphi 0, %s89
    %s106 = sphi 0, %s90
    %s112 = sphi 0, %s114
    %s115 = sphi 0, %s112
    %s116 = sphi 0, %s115
    %s132 = sphi 0, %s116
    %s140 = sphi 0, %s142
    %s143 = sphi 0, %s140
    %s144 = sphi 0, %s143
    %s160 = sphi 0, %s144
  $region4: #{bn_act_conv2d.1} parent=0 // loop_header_branch
    %13 = sbr.rel (%p11) target = $region8
  $region5: #{bn_act_conv2d.1} parent=0 // loop_body
    %s15 = ssub.s32 %s10, 1
    %s16 = ssub.s32 %s10, 2
    %s23 = sadd.s32 1, %s18
    %p24 = scmp.ge.s32.totalorder %s23, 2
    %s25 = scalar_select %p24, 0, %s23
    %s26 = sadd.s32 1, %s17
    %s27 = scalar_select %p24, %s26, %s17
    %p28 = scmp.ge.s32.totalorder %s27, 2
    %s29 = scalar_select %p28, 0, %s27
    %s30 = ssub.s32 %s17, %s29
    %s31 = ssub.s32 %s18, %s25
    %s32 = sor.u32 %s30, %s31
    %p33 = scmp.eq.s32.totalorder %s32, 0
    %s35 = sadd.s32 %s34, 1
    %s36 = scalar_select %p33, %s34, %s35
    %p39 = pneg %p33
    %p40 = scmp.eq.s32.totalorder %s10, 3
    %p41 = por %p39, %p40
    %p42 = scmp.ne.s32.totalorder %s34, %s37
    %p43 = scmp.eq.s32.totalorder %s10, 0
    %p44 = por %p42, %p43
    %p45 = scmp.ne.s32.totalorder %s34, %s37
    %p46 = scmp.eq.s32.totalorder %s15, 3
    %p47 = por %p45, %p46
    %p48 = scmp.ne.s32.totalorder %s37, %s38
    %p49 = scmp.eq.s32.totalorder %s15, 0
    %p50 = por %p48, %p49
    %p51 = scmp.ne.s32.totalorder %s37, %s38
    %p52 = scmp.eq.s32.totalorder %s16, 3
    %p53 = por %p51, %p52
    %p55 = scmp.ne.s32.totalorder %s38, %s54
    %p56 = scmp.eq.s32.totalorder %s16, 0
    %p57 = por %p55, %p56
    %s58 = ssub.s32 %s17, %s29
    %p59 = scmp.eq.s32.totalorder %s58, 0
    %s61 = sadd.s32 %s60, 1
    %s62 = scalar_select %p59, %s60, %s61
    %p65 = pneg %p59
    %p66 = scmp.eq.s32.totalorder %s10, 3
    %p67 = por %p65, %p66
    %p68 = scmp.ne.s32.totalorder %s60, %s63
    %p69 = scmp.eq.s32.totalorder %s10, 0
    %p70 = por %p68, %p69
    %p71 = scmp.ne.s32.totalorder %s60, %s63
    %p72 = scmp.eq.s32.totalorder %s15, 3
    %p73 = por %p71, %p72
    %p74 = scmp.ne.s32.totalorder %s63, %s64
    %p75 = scmp.eq.s32.totalorder %s15, 0
    %p76 = por %p74, %p75
    %p77 = scmp.ne.s32.totalorder %s63, %s64
    %p78 = scmp.eq.s32.totalorder %s16, 3
    %p79 = por %p77, %p78
    %p81 = scmp.ne.s32.totalorder %s64, %s80
    %p82 = scmp.eq.s32.totalorder %s16, 0
    %p83 = por %p81, %p82
    %s84 = ssub.s32 %s17, %s29
    %p85 = scmp.eq.s32.totalorder %s84, 0
    %s87 = sadd.s32 %s86, 1
    %s88 = scalar_select %p85, %s86, %s87
    %p91 = pneg %p85
    %p92 = scmp.eq.s32.totalorder %s10, 3
    %p93 = por %p91, %p92
    %p94 = scmp.ne.s32.totalorder %s86, %s89
    %p95 = scmp.eq.s32.totalorder %s10, 0
    %p96 = por %p94, %p95
    %p97 = scmp.ne.s32.totalorder %s86, %s89
    %p98 = scmp.eq.s32.totalorder %s15, 3
    %p99 = por %p97, %p98
    %p100 = scmp.ne.s32.totalorder %s89, %s90
    %p101 = scmp.eq.s32.totalorder %s15, 0
    %p102 = por %p100, %p101
    %p103 = scmp.ne.s32.totalorder %s89, %s90
    %p104 = scmp.eq.s32.totalorder %s16, 3
    %p105 = por %p103, %p104
    %p107 = scmp.ne.s32.totalorder %s90, %s106
    %p108 = scmp.eq.s32.totalorder %s16, 0
    %p109 = por %p107, %p108
    %s110 = ssub.s32 %s17, %s29
    %p111 = scmp.eq.s32.totalorder %s110, 0
    %s113 = sadd.s32 %s112, 1
    %s114 = scalar_select %p111, %s112, %s113
    %p117 = pneg %p111
    %p118 = scmp.eq.s32.totalorder %s10, 3
    %p119 = por %p117, %p118
    %p120 = scmp.ne.s32.totalorder %s112, %s115
    %p121 = scmp.eq.s32.totalorder %s10, 0
    %p122 = por %p120, %p121
    %p123 = scmp.ne.s32.totalorder %s112, %s115
    %p124 = scmp.eq.s32.totalorder %s15, 3
    %p125 = por %p123, %p124
    %p126 = scmp.ne.s32.totalorder %s115, %s116
    %p127 = scmp.eq.s32.totalorder %s15, 0
    %p128 = por %p126, %p127
    %p129 = scmp.ne.s32.totalorder %s115, %s116
    %p130 = scmp.eq.s32.totalorder %s16, 3
    %p131 = por %p129, %p130
    %p133 = scmp.ne.s32.totalorder %s116, %s132
    %p134 = scmp.eq.s32.totalorder %s16, 0
    %p135 = por %p133, %p134
    %s136 = ssub.s32 %s17, %s29
    %s137 = ssub.s32 %s18, %s25
    %s138 = sor.u32 %s136, %s137
    %p139 = scmp.eq.s32.totalorder %s138, 0
    %s141 = sadd.s32 %s140, 1
    %s142 = scalar_select %p139, %s140, %s141
    %p145 = pneg %p139
    %p146 = scmp.eq.s32.totalorder %s10, 3
    %p147 = por %p145, %p146
    %p148 = scmp.ne.s32.totalorder %s140, %s143
    %p149 = scmp.eq.s32.totalorder %s10, 0
    %p150 = por %p148, %p149
    %p151 = scmp.ne.s32.totalorder %s140, %s143
    %p152 = scmp.eq.s32.totalorder %s15, 3
    %p153 = por %p151, %p152
    %p154 = scmp.ne.s32.totalorder %s143, %s144
    %p155 = scmp.eq.s32.totalorder %s15, 0
    %p156 = por %p154, %p155
    %p157 = scmp.ne.s32.totalorder %s143, %s144
    %p158 = scmp.eq.s32.totalorder %s16, 3
    %p159 = por %p157, %p158
    %p161 = scmp.ne.s32.totalorder %s144, %s160
    %p162 = scmp.eq.s32.totalorder %s16, 0
    %p163 = por %p161, %p162
    %p164 = scmp.le.s32.totalorder 1, %s10
    %p165 = scmp.lt.s32.totalorder %s10, 5
    %p166 = pnand %p164, %p165
    %p167 = pneg %p166
    // Predicated region
    $region9: #{bn_act_conv2d.1} parent=5 // pred_check
      _
    $region10: #{bn_act_conv2d.1} parent=5 // pred_check_branch
      %169 = sbr.rel (%p166) target = $region12
    $region11: #{bn_act_conv2d.1} parent=5 // pred_region
      %s170 = ssub.s32 %s10, 1
    $region12: #{bn_act_conv2d.1} parent=5 // pred_fallthru
      _
    %p171 = scmp.lt.s32.totalorder %s10, 4
    // Predicated region
    $region13: #{bn_act_conv2d.1} parent=5 // pred_check
      %p172 = pneg %p171
    $region14: #{bn_act_conv2d.1} parent=5 // pred_check_branch
      %174 = sbr.rel (%p172) target = $region16
    $region15: #{bn_act_conv2d.1} parent=5 // pred_region
      // Predicated region
      $region17: #{bn_act_conv2d.1} parent=15 // pred_check
        %p175 = pneg %p44
      $region18: #{bn_act_conv2d.1} parent=15 // pred_check_branch
        %177 = sbr.rel (%p175) target = $region20
      $region19: #{bn_act_conv2d.1} parent=15 // pred_region
        %p178 = scmp.lt.s32.totalorder %s17, 1
        %s179 = scalar_select %p178, %s17, 1
        %p180 = scmp.lt.s32.totalorder %s18, 1
        %s181 = scalar_select %p180, %s18, 1
        %s182 = smul.addr %s181, 54
        %s183 = smul.addr %s179, 108
        %s184 = sadd.s32 %s182, %s183
        %s185 = smul.addr %s184, 8
        %s186 = scalar_lea.vmem %s0, %s185
      $region20: #{bn_act_conv2d.1} parent=15 // pred_fallthru
        _
      // Predicated region
      $region21: #{bn_act_conv2d.1} parent=15 // pred_check
        %p187 = pneg %p70
      $region22: #{bn_act_conv2d.1} parent=15 // pred_check_branch
        %189 = sbr.rel (%p187) target = $region24
      $region23: #{bn_act_conv2d.1} parent=15 // pred_region
        %p190 = scmp.lt.s32.totalorder %s17, 1
        %s191 = scalar_select %p190, %s17, 1
        %s192 = scalar_lea.vmem %s1, %s191
      $region24: #{bn_act_conv2d.1} parent=15 // pred_fallthru
        _
      // Predicated region
      $region25: #{bn_act_conv2d.1} parent=15 // pred_check
        %p193 = pneg %p96
      $region26: #{bn_act_conv2d.1} parent=15 // pred_check_branch
        %195 = sbr.rel (%p193) target = $region28
      $region27: #{bn_act_conv2d.1} parent=15 // pred_region
        %p196 = scmp.lt.s32.totalorder %s17, 1
        %s197 = scalar_select %p196, %s17, 1
        %s198 = scalar_lea.vmem %s2, %s197
      $region28: #{bn_act_conv2d.1} parent=15 // pred_fallthru
        _
      // Predicated region
      $region29: #{bn_act_conv2d.1} parent=15 // pred_check
        %p199 = pneg %p122
      $region30: #{bn_act_conv2d.1} parent=15 // pred_check_branch
        %201 = sbr.rel (%p199) target = $region32
      $region31: #{bn_act_conv2d.1} parent=15 // pred_region
        %p202 = scmp.lt.s32.totalorder %s17, 1
        %s203 = scalar_select %p202, %s17, 1
        %s204 = smul.addr %s203, 9
        %s205 = scalar_lea.vmem %s3, %s204
      $region32: #{bn_act_conv2d.1} parent=15 // pred_fallthru
        _
    $region16: #{bn_act_conv2d.1} parent=5 // pred_fallthru
      _
    %p206 = scmp.le.s32.totalorder 1, %s10
    %p207 = scmp.lt.s32.totalorder %s10, 5
    %p208 = pnand %p206, %p207
    %p209 = pneg %p208
    // Predicated region
    $region33: #{bn_act_conv2d.1} parent=5 // pred_check
      _
    $region34: #{bn_act_conv2d.1} parent=5 // pred_check_branch
      %211 = sbr.rel (%p208) target = $region36
    $region35: #{bn_act_conv2d.1} parent=5 // pred_region
      %s212 = ssub.s32 %s10, 1
      %p213 = scmp.lt.s32.totalorder %s19, 1
      %s214 = scalar_select %p213, %s19, 1
      %p215 = scmp.lt.s32.totalorder %s20, 1
      %s216 = scalar_select %p215, %s20, 1
      %s217 = smul.addr %s216, 54
      %s218 = smul.addr %s214, 108
      %s219 = sadd.s32 %s217, %s218
      %s220 = smul.addr %s219, 8
      %s221 = scalar_lea.vmem %s0, %s220
      %p222 = pneg %p50
      %p223 = pneg %p47
      %p224 = scmp.lt.s32.totalorder %s19, 1
      %s225 = scalar_select %p224, %s19, 1
      %s226 = scalar_lea.vmem %s1, %s225
      %p227 = pneg %p76
      %p228 = pneg %p73
      %p229 = scmp.lt.s32.totalorder %s19, 1
      %s230 = scalar_select %p229, %s19, 1
      %s231 = scalar_lea.vmem %s2, %s230
      %p232 = pneg %p102
      %p233 = pneg %p99
      %p234 = scmp.lt.s32.totalorder %s19, 1
      %s235 = scalar_select %p234, %s19, 1
      %s236 = smul.addr %s235, 9
      %s237 = scalar_lea.vmem %s3, %s236
      %p238 = pneg %p128
      %p239 = pneg %p125
      %p240 = pneg %p156
      %p241 = pneg %p153
      %p242 = scmp.lt.s32.totalorder %s19, 1
      %s243 = scalar_select %p242, %s19, 1
      %p244 = scmp.lt.s32.totalorder %s20, 1
      %s245 = scalar_select %p244, %s20, 1
      %s246 = smul.addr %s245, 32
      %s247 = smul.addr %s243, 64
      %s248 = sadd.s32 %s246, %s247
      %s249 = smul.addr %s248, 8
      %s250 = scalar_lea.vmem %s4, %s249
      %p251 = scmp.lt.s32.totalorder %s19, 1
      %s252 = scalar_select %p251, %s19, 1
      %p253 = scmp.lt.s32.totalorder %s20, 1
      %s254 = scalar_select %p253, %s20, 1
      %s255 = smul.addr %s254, 54
      %s256 = smul.addr %s252, 108
      %s257 = sadd.s32 %s255, %s256
      %s258 = smul.addr %s257, 8
      %s259 = scalar_lea.vmem %s0, %s258
      %p260 = scmp.lt.s32.totalorder %s19, 1
      %s261 = scalar_select %p260, %s19, 1
      %s262 = scalar_lea.vmem %s1, %s261
      %p263 = scmp.lt.s32.totalorder %s19, 1
      %s264 = scalar_select %p263, %s19, 1
      %s265 = scalar_lea.vmem %s2, %s264
      %p266 = scmp.lt.s32.totalorder %s19, 1
      %s267 = scalar_select %p266, %s19, 1
      %s268 = smul.addr %s267, 9
      %s269 = scalar_lea.vmem %s3, %s268
      %p270 = scmp.lt.s32.totalorder %s19, 1
      %s271 = scalar_select %p270, %s19, 1
      %p272 = scmp.lt.s32.totalorder %s20, 1
      %s273 = scalar_select %p272, %s20, 1
      %s274 = smul.addr %s273, 32
      %s275 = smul.addr %s271, 64
      %s276 = sadd.s32 %s274, %s275
      %s277 = smul.addr %s276, 8
      %s278 = scalar_lea.vmem %s4, %s277
      %v280 = vld [vmem:[%s259] sm:$0xff]
      %v281 = vld [vmem:[%s259 + $0x8] sm:$0xff]
      %v282 = vld [vmem:[%s259 + $0x10] sm:$0x3]
      %v283 = vld [vmem:[%s259 + $0x18] sm:$0xff]
      %v284 = vld [vmem:[%s259 + $0x20] sm:$0xff]
      %v285 = vld [vmem:[%s259 + $0x28] sm:$0x3]
      %v286 = vld [vmem:[%s259 + $0x30] sm:$0xff]
      %v287 = vld [vmem:[%s259 + $0x38] sm:$0xff]
      %v288 = vld [vmem:[%s259 + $0x40] sm:$0x3]
      %v289 = vld [vmem:[%s259 + $0x48] sm:$0xff]
      %v290 = vld [vmem:[%s259 + $0x50] sm:$0xff]
      %v291 = vld [vmem:[%s259 + $0x58] sm:$0x3]
      %v292 = vld [vmem:[%s259 + $0x60] sm:$0xff]
      %v293 = vld [vmem:[%s259 + $0x68] sm:$0xff]
      %v294 = vld [vmem:[%s259 + $0x70] sm:$0x3]
      %v295 = vld [vmem:[%s259 + $0x78] sm:$0xff]
      %v296 = vld [vmem:[%s259 + $0x80] sm:$0xff]
      %v297 = vld [vmem:[%s259 + $0x88] sm:$0x3]
      %v298 = vld [vmem:[%s259 + $0x90] sm:$0xff]
      %v299 = vld [vmem:[%s259 + $0x98] sm:$0xff]
      %v300 = vld [vmem:[%s259 + $0xa0] sm:$0x3]
      %v301 = vld [vmem:[%s259 + $0xa8] sm:$0xff]
      %v302 = vld [vmem:[%s259 + $0xb0] sm:$0xff]
      %v303 = vld [vmem:[%s259 + $0xb8] sm:$0x3]
      %v304 = vld [vmem:[%s259 + $0xc0] sm:$0xff]
      %v305 = vld [vmem:[%s259 + $0xc8] sm:$0xff]
      %v306 = vld [vmem:[%s259 + $0xd0] sm:$0x3]
      %v307 = vld [vmem:[%s259 + $0xd8] sm:$0xff]
      %v308 = vld [vmem:[%s259 + $0xe0] sm:$0xff]
      %v309 = vld [vmem:[%s259 + $0xe8] sm:$0x3]
      %v310 = vld [vmem:[%s259 + $0xf0] sm:$0xff]
      %v311 = vld [vmem:[%s259 + $0xf8] sm:$0xff]
      %v312 = vld [vmem:[%s259 + $0x100] sm:$0x3]
      %v313 = vld [vmem:[%s259 + $0x108] sm:$0xff]
      %v314 = vld [vmem:[%s259 + $0x110] sm:$0xff]
      %v315 = vld [vmem:[%s259 + $0x118] sm:$0x3]
      %v316 = vld [vmem:[%s259 + $0x120] sm:$0xff]
      %v317 = vld [vmem:[%s259 + $0x128] sm:$0xff]
      %v318 = vld [vmem:[%s259 + $0x130] sm:$0x3]
      %v319 = vld [vmem:[%s259 + $0x138] sm:$0xff]
      %v320 = vld [vmem:[%s259 + $0x140] sm:$0xff]
      %v321 = vld [vmem:[%s259 + $0x148] sm:$0x3]
      %v322 = vld [vmem:[%s259 + $0x150] sm:$0xff]
      %v323 = vld [vmem:[%s259 + $0x158] sm:$0xff]
      %v324 = vld [vmem:[%s259 + $0x160] sm:$0x3]
      %v325 = vld [vmem:[%s259 + $0x168] sm:$0xff]
      %v326 = vld [vmem:[%s259 + $0x170] sm:$0xff]
      %v327 = vld [vmem:[%s259 + $0x178] sm:$0x3]
      %v328 = vld [vmem:[%s259 + $0x180] sm:$0xff]
      %v329 = vld [vmem:[%s259 + $0x188] sm:$0xff]
      %v330 = vld [vmem:[%s259 + $0x190] sm:$0x3]
      %v331 = vld [vmem:[%s259 + $0x198] sm:$0xff]
      %v332 = vld [vmem:[%s259 + $0x1a0] sm:$0xff]
      %v333 = vld [vmem:[%s259 + $0x1a8] sm:$0x3]
      %v334 = vld [vmem:[%s262] sm:$0x1]
      %v336 = vlaneseq
      %v337 = vshrl.u32 %v336, 7
      %v338 = vsub.s32 0, %v337
      %v339 = vrot.slane %v334, %v338
      %v341 = vmul.f32 %v280, %v339
      %v342 = vmul.f32 %v281, %v339
      %v343 = vmul.f32 %v282, %v339
      %v344 = vmul.f32 %v283, %v339
      %v345 = vmul.f32 %v284, %v339
      %v346 = vmul.f32 %v285, %v339
      %v347 = vmul.f32 %v286, %v339
      %v348 = vmul.f32 %v287, %v339
      %v349 = vmul.f32 %v288, %v339
      %v350 = vmul.f32 %v289, %v339
      %v351 = vmul.f32 %v290, %v339
      %v352 = vmul.f32 %v291, %v339
      %v353 = vmul.f32 %v292, %v339
      %v354 = vmul.f32 %v293, %v339
      %v355 = vmul.f32 %v294, %v339
      %v356 = vmul.f32 %v295, %v339
      %v357 = vmul.f32 %v296, %v339
      %v358 = vmul.f32 %v297, %v339
      %v359 = vmul.f32 %v298, %v339
      %v360 = vmul.f32 %v299, %v339
      %v361 = vmul.f32 %v300, %v339
      %v362 = vmul.f32 %v301, %v339
      %v363 = vmul.f32 %v302, %v339
      %v364 = vmul.f32 %v303, %v339
      %v365 = vmul.f32 %v304, %v339
      %v366 = vmul.f32 %v305, %v339
      %v367 = vmul.f32 %v306, %v339
      %v368 = vmul.f32 %v307, %v339
      %v369 = vmul.f32 %v308, %v339
      %v370 = vmul.f32 %v309, %v339
      %v371 = vmul.f32 %v310, %v339
      %v372 = vmul.f32 %v311, %v339
      %v373 = vmul.f32 %v312, %v339
      %v374 = vmul.f32 %v313, %v339
      %v375 = vmul.f32 %v314, %v339
      %v376 = vmul.f32 %v315, %v339
      %v377 = vmul.f32 %v316, %v339
      %v378 = vmul.f32 %v317, %v339
      %v379 = vmul.f32 %v318, %v339
      %v380 = vmul.f32 %v319, %v339
      %v381 = vmul.f32 %v320, %v339
      %v382 = vmul.f32 %v321, %v339
      %v383 = vmul.f32 %v322, %v339
      %v384 = vmul.f32 %v323, %v339
      %v385 = vmul.f32 %v324, %v339
      %v386 = vmul.f32 %v325, %v339
      %v387 = vmul.f32 %v326, %v339
      %v388 = vmul.f32 %v327, %v339
      %v389 = vmul.f32 %v328, %v339
      %v390 = vmul.f32 %v329, %v339
      %v391 = vmul.f32 %v330, %v339
      %v392 = vmul.f32 %v331, %v339
      %v393 = vmul.f32 %v332, %v339
      %v394 = vmul.f32 %v333, %v339
      %v395 = vld [vmem:[%s265] sm:$0x1]
      %v397 = vlaneseq
      %v398 = vshrl.u32 %v397, 7
      %v399 = vsub.s32 0, %v398
      %v400 = vrot.slane %v395, %v399
      %v402 = vadd.f32 %v341, %v400
      %v403 = vadd.f32 %v342, %v400
      %v404 = vadd.f32 %v343, %v400
      %v405 = vadd.f32 %v344, %v400
      %v406 = vadd.f32 %v345, %v400
      %v407 = vadd.f32 %v346, %v400
      %v408 = vadd.f32 %v347, %v400
      %v409 = vadd.f32 %v348, %v400
      %v410 = vadd.f32 %v349, %v400
      %v411 = vadd.f32 %v350, %v400
      %v412 = vadd.f32 %v351, %v400
      %v413 = vadd.f32 %v352, %v400
      %v414 = vadd.f32 %v353, %v400
      %v415 = vadd.f32 %v354, %v400
      %v416 = vadd.f32 %v355, %v400
      %v417 = vadd.f32 %v356, %v400
      %v418 = vadd.f32 %v357, %v400
      %v419 = vadd.f32 %v358, %v400
      %v420 = vadd.f32 %v359, %v400
      %v421 = vadd.f32 %v360, %v400
      %v422 = vadd.f32 %v361, %v400
      %v423 = vadd.f32 %v362, %v400
      %v424 = vadd.f32 %v363, %v400
      %v425 = vadd.f32 %v364, %v400
      %v426 = vadd.f32 %v365, %v400
      %v427 = vadd.f32 %v366, %v400
      %v428 = vadd.f32 %v367, %v400
      %v429 = vadd.f32 %v368, %v400
      %v430 = vadd.f32 %v369, %v400
      %v431 = vadd.f32 %v370, %v400
      %v432 = vadd.f32 %v371, %v400
      %v433 = vadd.f32 %v372, %v400
      %v434 = vadd.f32 %v373, %v400
      %v435 = vadd.f32 %v374, %v400
      %v436 = vadd.f32 %v375, %v400
      %v437 = vadd.f32 %v376, %v400
      %v438 = vadd.f32 %v377, %v400
      %v439 = vadd.f32 %v378, %v400
      %v440 = vadd.f32 %v379, %v400
      %v441 = vadd.f32 %v380, %v400
      %v442 = vadd.f32 %v381, %v400
      %v443 = vadd.f32 %v382, %v400
      %v444 = vadd.f32 %v383, %v400
      %v445 = vadd.f32 %v384, %v400
      %v446 = vadd.f32 %v385, %v400
      %v447 = vadd.f32 %v386, %v400
      %v448 = vadd.f32 %v387, %v400
      %v449 = vadd.f32 %v388, %v400
      %v450 = vadd.f32 %v389, %v400
      %v451 = vadd.f32 %v390, %v400
      %v452 = vadd.f32 %v391, %v400
      %v453 = vadd.f32 %v392, %v400
      %v454 = vadd.f32 %v393, %v400
      %v455 = vadd.f32 %v394, %v400
      %v456 = vmax.f32 %v402, 0.0
      %v457 = vmax.f32 %v403, 0.0
      %v458 = vmax.f32 %v404, 0.0
      %v459 = vmax.f32 %v405, 0.0
      %v460 = vmax.f32 %v406, 0.0
      %v461 = vmax.f32 %v407, 0.0
      %v462 = vmax.f32 %v408, 0.0
      %v463 = vmax.f32 %v409, 0.0
      %v464 = vmax.f32 %v410, 0.0
      %v465 = vmax.f32 %v411, 0.0
      %v466 = vmax.f32 %v412, 0.0
      %v467 = vmax.f32 %v413, 0.0
      %v468 = vmax.f32 %v414, 0.0
      %v469 = vmax.f32 %v415, 0.0
      %v470 = vmax.f32 %v416, 0.0
      %v471 = vmax.f32 %v417, 0.0
      %v472 = vmax.f32 %v418, 0.0
      %v473 = vmax.f32 %v419, 0.0
      %v474 = vmax.f32 %v420, 0.0
      %v475 = vmax.f32 %v421, 0.0
      %v476 = vmax.f32 %v422, 0.0
      %v477 = vmax.f32 %v423, 0.0
      %v478 = vmax.f32 %v424, 0.0
      %v479 = vmax.f32 %v425, 0.0
      %v480 = vmax.f32 %v426, 0.0
      %v481 = vmax.f32 %v427, 0.0
      %v482 = vmax.f32 %v428, 0.0
      %v483 = vmax.f32 %v429, 0.0
      %v484 = vmax.f32 %v430, 0.0
      %v485 = vmax.f32 %v431, 0.0
      %v486 = vmax.f32 %v432, 0.0
      %v487 = vmax.f32 %v433, 0.0
      %v488 = vmax.f32 %v434, 0.0
      %v489 = vmax.f32 %v435, 0.0
      %v490 = vmax.f32 %v436, 0.0
      %v491 = vmax.f32 %v437, 0.0
      %v492 = vmax.f32 %v438, 0.0
      %v493 = vmax.f32 %v439, 0.0
      %v494 = vmax.f32 %v440, 0.0
      %v495 = vmax.f32 %v441, 0.0
      %v496 = vmax.f32 %v442, 0.0
      %v497 = vmax.f32 %v443, 0.0
      %v498 = vmax.f32 %v444, 0.0
      %v499 = vmax.f32 %v445, 0.0
      %v500 = vmax.f32 %v446, 0.0
      %v501 = vmax.f32 %v447, 0.0
      %v502 = vmax.f32 %v448, 0.0
      %v503 = vmax.f32 %v449, 0.0
      %v504 = vmax.f32 %v450, 0.0
      %v505 = vmax.f32 %v451, 0.0
      %v506 = vmax.f32 %v452, 0.0
      %v507 = vmax.f32 %v453, 0.0
      %v508 = vmax.f32 %v454, 0.0
      %v509 = vmax.f32 %v455, 0.0
      %v510 = vlaneseq
      %v511 = vshrl.u32 %v510, 7
      %v512 = vadd.s32 %v511, 8
      %v513 = vadd.s32 %v511, 16
      %vm514 = vcmp.ge.s32.totalorder %v511, 1
      %vm515 = vcmp.ge.s32.totalorder %v512, 1
      %vm516 = vcmp.ge.s32.totalorder %v513, 1
      %vm517 = vmand 0, %vm514
      %vm518 = vmand 0, %vm515
      %vm519 = vmand 0, %vm516
      %vm520 = vmand 1, %vm514
      %vm521 = vmand 1, %vm515
      %vm522 = vmand 1, %vm516
      %vm523 = vcmp.lt.s32.totalorder %v511, 17
      %vm524 = vcmp.lt.s32.totalorder %v512, 17
      %vm525 = vcmp.lt.s32.totalorder %v513, 17
      %vm526 = vmand %vm517, %vm523
      %vm527 = vmand %vm518, %vm524
      %vm528 = vmand %vm519, %vm525
      %vm529 = vmand %vm520, %vm523
      %vm530 = vmand %vm521, %vm524
      %vm531 = vmand %vm522, %vm525
      %v532 = vsel %vm526, %v456, 0.0
      %v533 = vsel %vm527, %v457, 0.0
      %v534 = vsel %vm528, %v458, 0.0
      %v535 = vsel %vm529, %v459, 0.0
      %v536 = vsel %vm530, %v460, 0.0
      %v537 = vsel %vm531, %v461, 0.0
      %v538 = vsel %vm529, %v462, 0.0
      %v539 = vsel %vm530, %v463, 0.0
      %v540 = vsel %vm531, %v464, 0.0
      %v541 = vsel %vm529, %v465, 0.0
      %v542 = vsel %vm530, %v466, 0.0
      %v543 = vsel %vm531, %v467, 0.0
      %v544 = vsel %vm529, %v468, 0.0
      %v545 = vsel %vm530, %v469, 0.0
      %v546 = vsel %vm531, %v470, 0.0
      %v547 = vsel %vm529, %v471, 0.0
      %v548 = vsel %vm530, %v472, 0.0
      %v549 = vsel %vm531, %v473, 0.0
      %v550 = vsel %vm529, %v474, 0.0
      %v551 = vsel %vm530, %v475, 0.0
      %v552 = vsel %vm531, %v476, 0.0
      %v553 = vsel %vm529, %v477, 0.0
      %v554 = vsel %vm530, %v478, 0.0
      %v555 = vsel %vm531, %v479, 0.0
      %v556 = vsel %vm529, %v480, 0.0
      %v557 = vsel %vm530, %v481, 0.0
      %v558 = vsel %vm531, %v482, 0.0
      %v559 = vsel %vm529, %v483, 0.0
      %v560 = vsel %vm530, %v484, 0.0
      %v561 = vsel %vm531, %v485, 0.0
      %v562 = vsel %vm529, %v486, 0.0
      %v563 = vsel %vm530, %v487, 0.0
      %v564 = vsel %vm531, %v488, 0.0
      %v565 = vsel %vm529, %v489, 0.0
      %v566 = vsel %vm530, %v490, 0.0
      %v567 = vsel %vm531, %v491, 0.0
      %v568 = vsel %vm529, %v492, 0.0
      %v569 = vsel %vm530, %v493, 0.0
      %v570 = vsel %vm531, %v494, 0.0
      %v571 = vsel %vm529, %v495, 0.0
      %v572 = vsel %vm530, %v496, 0.0
      %v573 = vsel %vm531, %v497, 0.0
      %v574 = vsel %vm529, %v498, 0.0
      %v575 = vsel %vm530, %v499, 0.0
      %v576 = vsel %vm531, %v500, 0.0
      %v577 = vsel %vm529, %v501, 0.0
      %v578 = vsel %vm530, %v502, 0.0
      %v579 = vsel %vm531, %v503, 0.0
      %v580 = vsel %vm529, %v504, 0.0
      %v581 = vsel %vm530, %v505, 0.0
      %v582 = vsel %vm531, %v506, 0.0
      %v583 = vsel %vm526, %v507, 0.0
      %v584 = vsel %vm527, %v508, 0.0
      %v585 = vsel %vm528, %v509, 0.0
      %v586 = vpack.c.bf16 %v533, %v532
      %v587 = vpack.c.bf16 %v536, %v535
      %v588 = vpack.c.bf16 %v539, %v538
      %v589 = vpack.c.bf16 %v542, %v541
      %v590 = vpack.c.bf16 %v545, %v544
      %v591 = vpack.c.bf16 %v548, %v547
      %v592 = vpack.c.bf16 %v551, %v550
      %v593 = vpack.c.bf16 %v554, %v553
      %v594 = vpack.c.bf16 %v557, %v556
      %v595 = vpack.c.bf16 %v560, %v559
      %v596 = vpack.c.bf16 %v563, %v562
      %v597 = vpack.c.bf16 %v566, %v565
      %v598 = vpack.c.bf16 %v569, %v568
      %v599 = vpack.c.bf16 %v572, %v571
      %v600 = vpack.c.bf16 %v575, %v574
      %v601 = vpack.c.bf16 %v578, %v577
      %v602 = vld [vmem:[%s269] sm:$0x1]
      %vm651 = vcmask 1046528
      %v652 = vrot.slane %v532, 1
      %v653 = vrot.slane %v533, 1
      %v654 = vsel %vm651, %v652, %v653
      %v655 = vrot.slane %v534, 1
      %v656 = vsel %vm651, %v653, %v655
      %v657 = vrot.slane %v535, 1
      %v658 = vrot.slane %v536, 1
      %v659 = vsel %vm651, %v657, %v658
      %v660 = vrot.slane %v537, 1
      %v661 = vsel %vm651, %v658, %v660
      %v662 = vrot.slane %v538, 1
      %v663 = vrot.slane %v539, 1
      %v664 = vsel %vm651, %v662, %v663
      %v665 = vrot.slane %v540, 1
      %v666 = vsel %vm651, %v663, %v665
      %v667 = vrot.slane %v541, 1
      %v668 = vrot.slane %v542, 1
      %v669 = vsel %vm651, %v667, %v668
      %v670 = vrot.slane %v543, 1
      %v671 = vsel %vm651, %v668, %v670
      %v672 = vrot.slane %v544, 1
      %v673 = vrot.slane %v545, 1
      %v674 = vsel %vm651, %v672, %v673
      %v675 = vrot.slane %v546, 1
      %v676 = vsel %vm651, %v673, %v675
      %v677 = vrot.slane %v547, 1
      %v678 = vrot.slane %v548, 1
      %v679 = vsel %vm651, %v677, %v678
      %v680 = vrot.slane %v549, 1
      %v681 = vsel %vm651, %v678, %v680
      %v682 = vrot.slane %v550, 1
      %v683 = vrot.slane %v551, 1
      %v684 = vsel %vm651, %v682, %v683
      %v685 = vrot.slane %v552, 1
      %v686 = vsel %vm651, %v683, %v685
      %v687 = vrot.slane %v553, 1
      %v688 = vrot.slane %v554, 1
      %v689 = vsel %vm651, %v687, %v688
      %v690 = vrot.slane %v555, 1
      %v691 = vsel %vm651, %v688, %v690
      %v692 = vrot.slane %v556, 1
      %v693 = vrot.slane %v557, 1
      %v694 = vsel %vm651, %v692, %v693
      %v695 = vrot.slane %v558, 1
      %v696 = vsel %vm651, %v693, %v695
      %v697 = vrot.slane %v559, 1
      %v698 = vrot.slane %v560, 1
      %v699 = vsel %vm651, %v697, %v698
      %v700 = vrot.slane %v561, 1
      %v701 = vsel %vm651, %v698, %v700
      %v702 = vrot.slane %v562, 1
      %v703 = vrot.slane %v563, 1
      %v704 = vsel %vm651, %v702, %v703
      %v705 = vrot.slane %v564, 1
      %v706 = vsel %vm651, %v703, %v705
      %v707 = vrot.slane %v565, 1
      %v708 = vrot.slane %v566, 1
      %v709 = vsel %vm651, %v707, %v708
      %v710 = vrot.slane %v567, 1
      %v711 = vsel %vm651, %v708, %v710
      %v712 = vrot.slane %v568, 1
      %v713 = vrot.slane %v569, 1
      %v714 = vsel %vm651, %v712, %v713
      %v715 = vrot.slane %v570, 1
      %v716 = vsel %vm651, %v713, %v715
      %v717 = vrot.slane %v571, 1
      %v718 = vrot.slane %v572, 1
      %v719 = vsel %vm651, %v717, %v718
      %v720 = vrot.slane %v573, 1
      %v721 = vsel %vm651, %v718, %v720
      %v722 = vrot.slane %v574, 1
      %v723 = vrot.slane %v575, 1
      %v724 = vsel %vm651, %v722, %v723
      %v725 = vrot.slane %v576, 1
      %v726 = vsel %vm651, %v723, %v725
      %v727 = vrot.slane %v577, 1
      %v728 = vrot.slane %v578, 1
      %v729 = vsel %vm651, %v727, %v728
      %v730 = vrot.slane %v579, 1
      %v731 = vsel %vm651, %v728, %v730
      %v764 = vpack.c.bf16 %v656, %v654
      %v765 = vpack.c.bf16 %v661, %v659
      %v766 = vpack.c.bf16 %v666, %v664
      %v767 = vpack.c.bf16 %v671, %v669
      %v768 = vpack.c.bf16 %v676, %v674
      %v769 = vpack.c.bf16 %v681, %v679
      %v770 = vpack.c.bf16 %v686, %v684
      %v771 = vpack.c.bf16 %v691, %v689
      %v772 = vpack.c.bf16 %v696, %v694
      %v773 = vpack.c.bf16 %v701, %v699
      %v774 = vpack.c.bf16 %v706, %v704
      %v775 = vpack.c.bf16 %v711, %v709
      %v776 = vpack.c.bf16 %v716, %v714
      %v777 = vpack.c.bf16 %v721, %v719
      %v778 = vpack.c.bf16 %v726, %v724
      %v779 = vpack.c.bf16 %v731, %v729
      %s780 = scalar_lea.vmem %s269, 1
      %v781 = vld [vmem:[%s780] sm:$0x1]
      %vm782 = vcmask 15360
      %v784 = vsel %vm782, %v764, 0
      %v787 = vsel %vm782, %v765, 0
      %v790 = vsel %vm782, %v766, 0
      %v793 = vsel %vm782, %v767, 0
      %v796 = vsel %vm782, %v768, 0
      %v799 = vsel %vm782, %v769, 0
      %v802 = vsel %vm782, %v770, 0
      %v805 = vsel %vm782, %v771, 0
      %v808 = vsel %vm782, %v772, 0
      %v811 = vsel %vm782, %v773, 0
      %v814 = vsel %vm782, %v774, 0
      %v817 = vsel %vm782, %v775, 0
      %v820 = vsel %vm782, %v776, 0
      %v823 = vsel %vm782, %v777, 0
      %v826 = vsel %vm782, %v778, 0
      %v829 = vsel %vm782, %v779, 0
      %vm831 = vcmask 1040384
      %v833 = vsel %vm831, %v781, 0
      %835 = vmatprep.subr.bf16.mxu0 0
      %836 = vmatpush1.bf16.msra.mxu0 0
      %837 = vmatprep.subr.bf16.mxu0 0
      %838 = vmatpush1.bf16.msra.mxu0 0
      %839 = vmatprep.subr.bf16.mxu0 0
      %840 = vmatpush1.bf16.msra.mxu0 0
      %841 = vmatprep.subr.bf16.mxu0 0
      %842 = vmatpush1.bf16.msra.mxu0 0
      %843 = vmatprep.subr.bf16.mxu0 0
      %844 = vmatpush1.bf16.msra.mxu0 0
      %845 = vmatprep.subr.bf16.mxu0 0
      %846 = vmatpush1.bf16.msra.mxu0 0
      %847 = vmatprep.subr.bf16.mxu0 0
      %848 = vmatpush1.bf16.msra.mxu0 0
      %849 = vmatprep.subr.bf16.mxu0 0
      %850 = vmatpush1.bf16.msra.mxu0 %v833
      %851 = vmatprep.subr.bf16.mxu0 0
      %852 = vmatpush2.bf16.msra.mxu0 0
      %853 = vmatprep.subr.bf16.mxu0 0
      %854 = vmatpush2.bf16.msra.mxu0 0
      %855 = vmatprep.subr.bf16.mxu0 0
      %856 = vmatpush2.bf16.msra.mxu0 0
      %857 = vmatprep.subr.bf16.mxu0 0
      %858 = vmatpush2.bf16.msra.mxu0 0
      %859 = vmatprep.subr.bf16.mxu0 0
      %860 = vmatpush2.bf16.msra.mxu0 0
      %861 = vmatprep.subr.bf16.mxu0 0
      %862 = vmatpush2.bf16.msra.mxu0 0
      %863 = vmatprep.subr.bf16.mxu0 0
      %864 = vmatpush2.bf16.msra.mxu0 0
      %865 = vmatprep.subr.bf16.mxu0 0
      %866 = vmatpush2.bf16.msra.mxu0 0
      %867 = vmatprep.mubr.bf16.mxu0 0
      %868 = vmatmul.mubr.bf16.gmra.mxu0 %v784
      %v869 = vpop.f32.mrf.mxu0
      %v870 = vadd.f32 0.0, %v869
      %v871 = vpop.f32.mrf.mxu0
      %v872 = vpop.f32.mrf.mxu0
      %v873 = vadd.f32 0.0, %v872
      %v874 = vpop.f32.mrf.mxu0
      %875 = vmatprep.mubr.bf16.mxu0 0
      %876 = vmatmul.mubr.bf16.gmra.mxu0 %v787
      %v877 = vpop.f32.mrf.mxu0
      %v878 = vadd.f32 0.0, %v877
      %v879 = vpop.f32.mrf.mxu0
      %v880 = vpop.f32.mrf.mxu0
      %v881 = vadd.f32 0.0, %v880
      %v882 = vpop.f32.mrf.mxu0
      %883 = vmatprep.mubr.bf16.mxu0 0
      %884 = vmatmul.mubr.bf16.gmra.mxu0 %v790
      %v885 = vpop.f32.mrf.mxu0
      %v886 = vadd.f32 0.0, %v885
      %v887 = vpop.f32.mrf.mxu0
      %v888 = vpop.f32.mrf.mxu0
      %v889 = vadd.f32 0.0, %v888
      %v890 = vpop.f32.mrf.mxu0
      %891 = vmatprep.mubr.bf16.mxu0 0
      %892 = vmatmul.mubr.bf16.gmra.mxu0 %v793
      %v893 = vpop.f32.mrf.mxu0
      %v894 = vadd.f32 0.0, %v893
      %v895 = vpop.f32.mrf.mxu0
      %v896 = vpop.f32.mrf.mxu0
      %v897 = vadd.f32 0.0, %v896
      %v898 = vpop.f32.mrf.mxu0
      %899 = vmatprep.mubr.bf16.mxu0 0
      %900 = vmatmul.mubr.bf16.gmra.mxu0 %v796
      %v901 = vpop.f32.mrf.mxu0
      %v902 = vadd.f32 0.0, %v901
      %v903 = vpop.f32.mrf.mxu0
      %v904 = vpop.f32.mrf.mxu0
      %v905 = vadd.f32 0.0, %v904
      %v906 = vpop.f32.mrf.mxu0
      %907 = vmatprep.mubr.bf16.mxu0 0
      %908 = vmatmul.mubr.bf16.gmra.mxu0 %v799
      %v909 = vpop.f32.mrf.mxu0
      %v910 = vadd.f32 0.0, %v909
      %v911 = vpop.f32.mrf.mxu0
      %v912 = vpop.f32.mrf.mxu0
      %v913 = vadd.f32 0.0, %v912
      %v914 = vpop.f32.mrf.mxu0
      %915 = vmatprep.mubr.bf16.mxu0 0
      %916 = vmatmul.mubr.bf16.gmra.mxu0 %v802
      %v917 = vpop.f32.mrf.mxu0
      %v918 = vadd.f32 0.0, %v917
      %v919 = vpop.f32.mrf.mxu0
      %v920 = vpop.f32.mrf.mxu0
      %v921 = vadd.f32 0.0, %v920
      %v922 = vpop.f32.mrf.mxu0
      %923 = vmatprep.mubr.bf16.mxu0 0
      %924 = vmatmul.mubr.bf16.gmra.mxu0 %v805
      %v925 = vpop.f32.mrf.mxu0
      %v926 = vadd.f32 0.0, %v925
      %v927 = vpop.f32.mrf.mxu0
      %v928 = vpop.f32.mrf.mxu0
      %v929 = vadd.f32 0.0, %v928
      %v930 = vpop.f32.mrf.mxu0
      %931 = vmatprep.mubr.bf16.mxu0 0
      %932 = vmatmul.mubr.bf16.gmra.mxu0 %v808
      %v933 = vpop.f32.mrf.mxu0
      %v934 = vadd.f32 0.0, %v933
      %v935 = vpop.f32.mrf.mxu0
      %v936 = vpop.f32.mrf.mxu0
      %v937 = vadd.f32 0.0, %v936
      %v938 = vpop.f32.mrf.mxu0
      %939 = vmatprep.mubr.bf16.mxu0 0
      %940 = vmatmul.mubr.bf16.gmra.mxu0 %v811
      %v941 = vpop.f32.mrf.mxu0
      %v942 = vadd.f32 0.0, %v941
      %v943 = vpop.f32.mrf.mxu0
      %v944 = vpop.f32.mrf.mxu0
      %v945 = vadd.f32 0.0, %v944
      %v946 = vpop.f32.mrf.mxu0
      %947 = vmatprep.mubr.bf16.mxu0 0
      %948 = vmatmul.mubr.bf16.gmra.mxu0 %v814
      %v949 = vpop.f32.mrf.mxu0
      %v950 = vadd.f32 0.0, %v949
      %v951 = vpop.f32.mrf.mxu0
      %v952 = vpop.f32.mrf.mxu0
      %v953 = vadd.f32 0.0, %v952
      %v954 = vpop.f32.mrf.mxu0
      %955 = vmatprep.mubr.bf16.mxu0 0
      %956 = vmatmul.mubr.bf16.gmra.mxu0 %v817
      %v957 = vpop.f32.mrf.mxu0
      %v958 = vadd.f32 0.0, %v957
      %v959 = vpop.f32.mrf.mxu0
      %v960 = vpop.f32.mrf.mxu0
      %v961 = vadd.f32 0.0, %v960
      %v962 = vpop.f32.mrf.mxu0
      %963 = vmatprep.mubr.bf16.mxu0 0
      %964 = vmatmul.mubr.bf16.gmra.mxu0 %v820
      %v965 = vpop.f32.mrf.mxu0
      %v966 = vadd.f32 0.0, %v965
      %v967 = vpop.f32.mrf.mxu0
      %v968 = vpop.f32.mrf.mxu0
      %v969 = vadd.f32 0.0, %v968
      %v970 = vpop.f32.mrf.mxu0
      %971 = vmatprep.mubr.bf16.mxu0 0
      %972 = vmatmul.mubr.bf16.gmra.mxu0 %v823
      %v973 = vpop.f32.mrf.mxu0
      %v974 = vadd.f32 0.0, %v973
      %v975 = vpop.f32.mrf.mxu0
      %v976 = vpop.f32.mrf.mxu0
      %v977 = vadd.f32 0.0, %v976
      %v978 = vpop.f32.mrf.mxu0
      %979 = vmatprep.mubr.bf16.mxu0 0
      %980 = vmatmul.mubr.bf16.gmra.mxu0 %v826
      %v981 = vpop.f32.mrf.mxu0
      %v982 = vadd.f32 0.0, %v981
      %v983 = vpop.f32.mrf.mxu0
      %v984 = vpop.f32.mrf.mxu0
      %v985 = vadd.f32 0.0, %v984
      %v986 = vpop.f32.mrf.mxu0
      %987 = vmatprep.mubr.bf16.mxu0 0
      %988 = vmatmul.mubr.bf16.gmra.mxu0 %v829
      %v989 = vpop.f32.mrf.mxu0
      %v990 = vadd.f32 0.0, %v989
      %v991 = vpop.f32.mrf.mxu0
      %v992 = vpop.f32.mrf.mxu0
      %v993 = vadd.f32 0.0, %v992
      %v994 = vpop.f32.mrf.mxu0
      %995 = vdwg.mxu0
      %v997 = vsel %vm782, %v586, 0
      %v1000 = vsel %vm782, %v587, 0
      %v1003 = vsel %vm782, %v588, 0
      %v1006 = vsel %vm782, %v589, 0
      %v1009 = vsel %vm782, %v590, 0
      %v1012 = vsel %vm782, %v591, 0
      %v1015 = vsel %vm782, %v592, 0
      %v1018 = vsel %vm782, %v593, 0
      %v1021 = vsel %vm782, %v594, 0
      %v1024 = vsel %vm782, %v595, 0
      %v1027 = vsel %vm782, %v596, 0
      %v1030 = vsel %vm782, %v597, 0
      %v1033 = vsel %vm782, %v598, 0
      %v1036 = vsel %vm782, %v599, 0
      %v1039 = vsel %vm782, %v600, 0
      %v1042 = vsel %vm782, %v601, 0
      %v1045 = vsel %vm831, %v602, 0
      %1047 = vmatprep.subr.bf16.mxu0 0
      %1048 = vmatpush1.bf16.msra.mxu0 0
      %1049 = vmatprep.subr.bf16.mxu0 0
      %1050 = vmatpush1.bf16.msra.mxu0 0
      %1051 = vmatprep.subr.bf16.mxu0 0
      %1052 = vmatpush1.bf16.msra.mxu0 0
      %1053 = vmatprep.subr.bf16.mxu0 0
      %1054 = vmatpush1.bf16.msra.mxu0 0
      %1055 = vmatprep.subr.bf16.mxu0 0
      %1056 = vmatpush1.bf16.msra.mxu0 0
      %1057 = vmatprep.subr.bf16.mxu0 0
      %1058 = vmatpush1.bf16.msra.mxu0 0
      %1059 = vmatprep.subr.bf16.mxu0 0
      %1060 = vmatpush1.bf16.msra.mxu0 0
      %1061 = vmatprep.subr.bf16.mxu0 0
      %1062 = vmatpush1.bf16.msra.mxu0 %v1045
      %1063 = vmatprep.subr.bf16.mxu0 0
      %1064 = vmatpush2.bf16.msra.mxu0 0
      %1065 = vmatprep.subr.bf16.mxu0 0
      %1066 = vmatpush2.bf16.msra.mxu0 0
      %1067 = vmatprep.subr.bf16.mxu0 0
      %1068 = vmatpush2.bf16.msra.mxu0 0
      %1069 = vmatprep.subr.bf16.mxu0 0
      %1070 = vmatpush2.bf16.msra.mxu0 0
      %1071 = vmatprep.subr.bf16.mxu0 0
      %1072 = vmatpush2.bf16.msra.mxu0 0
      %1073 = vmatprep.subr.bf16.mxu0 0
      %1074 = vmatpush2.bf16.msra.mxu0 0
      %1075 = vmatprep.subr.bf16.mxu0 0
      %1076 = vmatpush2.bf16.msra.mxu0 0
      %1077 = vmatprep.subr.bf16.mxu0 0
      %1078 = vmatpush2.bf16.msra.mxu0 0
      %1079 = vmatprep.mubr.bf16.mxu0 0
      %1080 = vmatmul.mubr.bf16.gmra.mxu0 %v997
      %v1081 = vpop.f32.mrf.mxu0
      %v1082 = vadd.f32 %v870, %v1081
      %v1083 = vpop.f32.mrf.mxu0
      %v1084 = vpop.f32.mrf.mxu0
      %v1085 = vadd.f32 %v873, %v1084
      %v1086 = vpop.f32.mrf.mxu0
      %1087 = vmatprep.mubr.bf16.mxu0 0
      %1088 = vmatmul.mubr.bf16.gmra.mxu0 %v1000
      %v1089 = vpop.f32.mrf.mxu0
      %v1090 = vadd.f32 %v878, %v1089
      %v1091 = vpop.f32.mrf.mxu0
      %v1092 = vpop.f32.mrf.mxu0
      %v1093 = vadd.f32 %v881, %v1092
      %v1094 = vpop.f32.mrf.mxu0
      %1095 = vmatprep.mubr.bf16.mxu0 0
      %1096 = vmatmul.mubr.bf16.gmra.mxu0 %v1003
      %v1097 = vpop.f32.mrf.mxu0
      %v1098 = vadd.f32 %v886, %v1097
      %v1099 = vpop.f32.mrf.mxu0
      %v1100 = vpop.f32.mrf.mxu0
      %v1101 = vadd.f32 %v889, %v1100
      %v1102 = vpop.f32.mrf.mxu0
      %1103 = vmatprep.mubr.bf16.mxu0 0
      %1104 = vmatmul.mubr.bf16.gmra.mxu0 %v1006
      %v1105 = vpop.f32.mrf.mxu0
      %v1106 = vadd.f32 %v894, %v1105
      %v1107 = vpop.f32.mrf.mxu0
      %v1108 = vpop.f32.mrf.mxu0
      %v1109 = vadd.f32 %v897, %v1108
      %v1110 = vpop.f32.mrf.mxu0
      %1111 = vmatprep.mubr.bf16.mxu0 0
      %1112 = vmatmul.mubr.bf16.gmra.mxu0 %v1009
      %v1113 = vpop.f32.mrf.mxu0
      %v1114 = vadd.f32 %v902, %v1113
      %v1115 = vpop.f32.mrf.mxu0
      %v1116 = vpop.f32.mrf.mxu0
      %v1117 = vadd.f32 %v905, %v1116
      %v1118 = vpop.f32.mrf.mxu0
      %1119 = vmatprep.mubr.bf16.mxu0 0
      %1120 = vmatmul.mubr.bf16.gmra.mxu0 %v1012
      %v1121 = vpop.f32.mrf.mxu0
      %v1122 = vadd.f32 %v910, %v1121
      %v1123 = vpop.f32.mrf.mxu0
      %v1124 = vpop.f32.mrf.mxu0
      %v1125 = vadd.f32 %v913, %v1124
      %v1126 = vpop.f32.mrf.mxu0
      %1127 = vmatprep.mubr.bf16.mxu0 0
      %1128 = vmatmul.mubr.bf16.gmra.mxu0 %v1015
      %v1129 = vpop.f32.mrf.mxu0
      %v1130 = vadd.f32 %v918, %v1129
      %v1131 = vpop.f32.mrf.mxu0
      %v1132 = vpop.f32.mrf.mxu0
      %v1133 = vadd.f32 %v921, %v1132
      %v1134 = vpop.f32.mrf.mxu0
      %1135 = vmatprep.mubr.bf16.mxu0 0
      %1136 = vmatmul.mubr.bf16.gmra.mxu0 %v1018
      %v1137 = vpop.f32.mrf.mxu0
      %v1138 = vadd.f32 %v926, %v1137
      %v1139 = vpop.f32.mrf.mxu0
      %v1140 = vpop.f32.mrf.mxu0
      %v1141 = vadd.f32 %v929, %v1140
      %v1142 = vpop.f32.mrf.mxu0
      %1143 = vmatprep.mubr.bf16.mxu0 0
      %1144 = vmatmul.mubr.bf16.gmra.mxu0 %v1021
      %v1145 = vpop.f32.mrf.mxu0
      %v1146 = vadd.f32 %v934, %v1145
      %v1147 = vpop.f32.mrf.mxu0
      %v1148 = vpop.f32.mrf.mxu0
      %v1149 = vadd.f32 %v937, %v1148
      %v1150 = vpop.f32.mrf.mxu0
      %1151 = vmatprep.mubr.bf16.mxu0 0
      %1152 = vmatmul.mubr.bf16.gmra.mxu0 %v1024
      %v1153 = vpop.f32.mrf.mxu0
      %v1154 = vadd.f32 %v942, %v1153
      %v1155 = vpop.f32.mrf.mxu0
      %v1156 = vpop.f32.mrf.mxu0
      %v1157 = vadd.f32 %v945, %v1156
      %v1158 = vpop.f32.mrf.mxu0
      %1159 = vmatprep.mubr.bf16.mxu0 0
      %1160 = vmatmul.mubr.bf16.gmra.mxu0 %v1027
      %v1161 = vpop.f32.mrf.mxu0
      %v1162 = vadd.f32 %v950, %v1161
      %v1163 = vpop.f32.mrf.mxu0
      %v1164 = vpop.f32.mrf.mxu0
      %v1165 = vadd.f32 %v953, %v1164
      %v1166 = vpop.f32.mrf.mxu0
      %1167 = vmatprep.mubr.bf16.mxu0 0
      %1168 = vmatmul.mubr.bf16.gmra.mxu0 %v1030
      %v1169 = vpop.f32.mrf.mxu0
      %v1170 = vadd.f32 %v958, %v1169
      %v1171 = vpop.f32.mrf.mxu0
      %v1172 = vpop.f32.mrf.mxu0
      %v1173 = vadd.f32 %v961, %v1172
      %v1174 = vpop.f32.mrf.mxu0
      %1175 = vmatprep.mubr.bf16.mxu0 0
      %1176 = vmatmul.mubr.bf16.gmra.mxu0 %v1033
      %v1177 = vpop.f32.mrf.mxu0
      %v1178 = vadd.f32 %v966, %v1177
      %v1179 = vpop.f32.mrf.mxu0
      %v1180 = vpop.f32.mrf.mxu0
      %v1181 = vadd.f32 %v969, %v1180
      %v1182 = vpop.f32.mrf.mxu0
      %1183 = vmatprep.mubr.bf16.mxu0 0
      %1184 = vmatmul.mubr.bf16.gmra.mxu0 %v1036
      %v1185 = vpop.f32.mrf.mxu0
      %v1186 = vadd.f32 %v974, %v1185
      %v1187 = vpop.f32.mrf.mxu0
      %v1188 = vpop.f32.mrf.mxu0
      %v1189 = vadd.f32 %v977, %v1188
      %v1190 = vpop.f32.mrf.mxu0
      %1191 = vmatprep.mubr.bf16.mxu0 0
      %1192 = vmatmul.mubr.bf16.gmra.mxu0 %v1039
      %v1193 = vpop.f32.mrf.mxu0
      %v1194 = vadd.f32 %v982, %v1193
      %v1195 = vpop.f32.mrf.mxu0
      %v1196 = vpop.f32.mrf.mxu0
      %v1197 = vadd.f32 %v985, %v1196
      %v1198 = vpop.f32.mrf.mxu0
      %1199 = vmatprep.mubr.bf16.mxu0 0
      %1200 = vmatmul.mubr.bf16.gmra.mxu0 %v1042
      %v1201 = vpop.f32.mrf.mxu0
      %v1202 = vadd.f32 %v990, %v1201
      %v1203 = vpop.f32.mrf.mxu0
      %v1204 = vpop.f32.mrf.mxu0
      %v1205 = vadd.f32 %v993, %v1204
      %v1206 = vpop.f32.mrf.mxu0
      %1207 = vdwg.mxu0
      %vm1208 = vcmask 1045504
      %v1209 = vrot.slane %v532, 2
      %v1210 = vrot.slane %v533, 2
      %v1211 = vsel %vm1208, %v1209, %v1210
      %v1212 = vrot.slane %v534, 2
      %v1213 = vsel %vm1208, %v1210, %v1212
      %v1214 = vrot.slane %v535, 2
      %v1215 = vrot.slane %v536, 2
      %v1216 = vsel %vm1208, %v1214, %v1215
      %v1217 = vrot.slane %v537, 2
      %v1218 = vsel %vm1208, %v1215, %v1217
      %v1219 = vrot.slane %v538, 2
      %v1220 = vrot.slane %v539, 2
      %v1221 = vsel %vm1208, %v1219, %v1220
      %v1222 = vrot.slane %v540, 2
      %v1223 = vsel %vm1208, %v1220, %v1222
      %v1224 = vrot.slane %v541, 2
      %v1225 = vrot.slane %v542, 2
      %v1226 = vsel %vm1208, %v1224, %v1225
      %v1227 = vrot.slane %v543, 2
      %v1228 = vsel %vm1208, %v1225, %v1227
      %v1229 = vrot.slane %v544, 2
      %v1230 = vrot.slane %v545, 2
      %v1231 = vsel %vm1208, %v1229, %v1230
      %v1232 = vrot.slane %v546, 2
      %v1233 = vsel %vm1208, %v1230, %v1232
      %v1234 = vrot.slane %v547, 2
      %v1235 = vrot.slane %v548, 2
      %v1236 = vsel %vm1208, %v1234, %v1235
      %v1237 = vrot.slane %v549, 2
      %v1238 = vsel %vm1208, %v1235, %v1237
      %v1239 = vrot.slane %v550, 2
      %v1240 = vrot.slane %v551, 2
      %v1241 = vsel %vm1208, %v1239, %v1240
      %v1242 = vrot.slane %v552, 2
      %v1243 = vsel %vm1208, %v1240, %v1242
      %v1244 = vrot.slane %v553, 2
      %v1245 = vrot.slane %v554, 2
      %v1246 = vsel %vm1208, %v1244, %v1245
      %v1247 = vrot.slane %v555, 2
      %v1248 = vsel %vm1208, %v1245, %v1247
      %v1249 = vrot.slane %v556, 2
      %v1250 = vrot.slane %v557, 2
      %v1251 = vsel %vm1208, %v1249, %v1250
      %v1252 = vrot.slane %v558, 2
      %v1253 = vsel %vm1208, %v1250, %v1252
      %v1254 = vrot.slane %v559, 2
      %v1255 = vrot.slane %v560, 2
      %v1256 = vsel %vm1208, %v1254, %v1255
      %v1257 = vrot.slane %v561, 2
      %v1258 = vsel %vm1208, %v1255, %v1257
      %v1259 = vrot.slane %v562, 2
      %v1260 = vrot.slane %v563, 2
      %v1261 = vsel %vm1208, %v1259, %v1260
      %v1262 = vrot.slane %v564, 2
      %v1263 = vsel %vm1208, %v1260, %v1262
      %v1264 = vrot.slane %v565, 2
      %v1265 = vrot.slane %v566, 2
      %v1266 = vsel %vm1208, %v1264, %v1265
      %v1267 = vrot.slane %v567, 2
      %v1268 = vsel %vm1208, %v1265, %v1267
      %v1269 = vrot.slane %v568, 2
      %v1270 = vrot.slane %v569, 2
      %v1271 = vsel %vm1208, %v1269, %v1270
      %v1272 = vrot.slane %v570, 2
      %v1273 = vsel %vm1208, %v1270, %v1272
      %v1274 = vrot.slane %v571, 2
      %v1275 = vrot.slane %v572, 2
      %v1276 = vsel %vm1208, %v1274, %v1275
      %v1277 = vrot.slane %v573, 2
      %v1278 = vsel %vm1208, %v1275, %v1277
      %v1279 = vrot.slane %v574, 2
      %v1280 = vrot.slane %v575, 2
      %v1281 = vsel %vm1208, %v1279, %v1280
      %v1282 = vrot.slane %v576, 2
      %v1283 = vsel %vm1208, %v1280, %v1282
      %v1284 = vrot.slane %v577, 2
      %v1285 = vrot.slane %v578, 2
      %v1286 = vsel %vm1208, %v1284, %v1285
      %v1287 = vrot.slane %v579, 2
      %v1288 = vsel %vm1208, %v1285, %v1287
      %v1321 = vpack.c.bf16 %v1213, %v1211
      %v1322 = vpack.c.bf16 %v1218, %v1216
      %v1323 = vpack.c.bf16 %v1223, %v1221
      %v1324 = vpack.c.bf16 %v1228, %v1226
      %v1325 = vpack.c.bf16 %v1233, %v1231
      %v1326 = vpack.c.bf16 %v1238, %v1236
      %v1327 = vpack.c.bf16 %v1243, %v1241
      %v1328 = vpack.c.bf16 %v1248, %v1246
      %v1329 = vpack.c.bf16 %v1253, %v1251
      %v1330 = vpack.c.bf16 %v1258, %v1256
      %v1331 = vpack.c.bf16 %v1263, %v1261
      %v1332 = vpack.c.bf16 %v1268, %v1266
      %v1333 = vpack.c.bf16 %v1273, %v1271
      %v1334 = vpack.c.bf16 %v1278, %v1276
      %v1335 = vpack.c.bf16 %v1283, %v1281
      %v1336 = vpack.c.bf16 %v1288, %v1286
      %s1337 = scalar_lea.vmem %s269, 2
      %v1338 = vld [vmem:[%s1337] sm:$0x1]
      %v1340 = vsel %vm782, %v1321, 0
      %v1343 = vsel %vm782, %v1322, 0
      %v1346 = vsel %vm782, %v1323, 0
      %v1349 = vsel %vm782, %v1324, 0
      %v1352 = vsel %vm782, %v1325, 0
      %v1355 = vsel %vm782, %v1326, 0
      %v1358 = vsel %vm782, %v1327, 0
      %v1361 = vsel %vm782, %v1328, 0
      %v1364 = vsel %vm782, %v1329, 0
      %v1367 = vsel %vm782, %v1330, 0
      %v1370 = vsel %vm782, %v1331, 0
      %v1373 = vsel %vm782, %v1332, 0
      %v1376 = vsel %vm782, %v1333, 0
      %v1379 = vsel %vm782, %v1334, 0
      %v1382 = vsel %vm782, %v1335, 0
      %v1385 = vsel %vm782, %v1336, 0
      %v1388 = vsel %vm831, %v1338, 0
      %1390 = vmatprep.subr.bf16.mxu0 0
      %1391 = vmatpush1.bf16.msra.mxu0 0
      %1392 = vmatprep.subr.bf16.mxu0 0
      %1393 = vmatpush1.bf16.msra.mxu0 0
      %1394 = vmatprep.subr.bf16.mxu0 0
      %1395 = vmatpush1.bf16.msra.mxu0 0
      %1396 = vmatprep.subr.bf16.mxu0 0
      %1397 = vmatpush1.bf16.msra.mxu0 0
      %1398 = vmatprep.subr.bf16.mxu0 0
      %1399 = vmatpush1.bf16.msra.mxu0 0
      %1400 = vmatprep.subr.bf16.mxu0 0
      %1401 = vmatpush1.bf16.msra.mxu0 0
      %1402 = vmatprep.subr.bf16.mxu0 0
      %1403 = vmatpush1.bf16.msra.mxu0 0
      %1404 = vmatprep.subr.bf16.mxu0 0
      %1405 = vmatpush1.bf16.msra.mxu0 %v1388
      %1406 = vmatprep.subr.bf16.mxu0 0
      %1407 = vmatpush2.bf16.msra.mxu0 0
      %1408 = vmatprep.subr.bf16.mxu0 0
      %1409 = vmatpush2.bf16.msra.mxu0 0
      %1410 = vmatprep.subr.bf16.mxu0 0
      %1411 = vmatpush2.bf16.msra.mxu0 0
      %1412 = vmatprep.subr.bf16.mxu0 0
      %1413 = vmatpush2.bf16.msra.mxu0 0
      %1414 = vmatprep.subr.bf16.mxu0 0
      %1415 = vmatpush2.bf16.msra.mxu0 0
      %1416 = vmatprep.subr.bf16.mxu0 0
      %1417 = vmatpush2.bf16.msra.mxu0 0
      %1418 = vmatprep.subr.bf16.mxu0 0
      %1419 = vmatpush2.bf16.msra.mxu0 0
      %1420 = vmatprep.subr.bf16.mxu0 0
      %1421 = vmatpush2.bf16.msra.mxu0 0
      %1422 = vmatprep.mubr.bf16.mxu0 0
      %1423 = vmatmul.mubr.bf16.gmra.mxu0 %v1340
      %v1424 = vpop.f32.mrf.mxu0
      %v1425 = vadd.f32 0.0, %v1424
      %v1426 = vpop.f32.mrf.mxu0
      %v1427 = vpop.f32.mrf.mxu0
      %v1428 = vadd.f32 0.0, %v1427
      %v1429 = vpop.f32.mrf.mxu0
      %1430 = vmatprep.mubr.bf16.mxu0 0
      %1431 = vmatmul.mubr.bf16.gmra.mxu0 %v1343
      %v1432 = vpop.f32.mrf.mxu0
      %v1433 = vadd.f32 0.0, %v1432
      %v1434 = vpop.f32.mrf.mxu0
      %v1435 = vpop.f32.mrf.mxu0
      %v1436 = vadd.f32 0.0, %v1435
      %v1437 = vpop.f32.mrf.mxu0
      %1438 = vmatprep.mubr.bf16.mxu0 0
      %1439 = vmatmul.mubr.bf16.gmra.mxu0 %v1346
      %v1440 = vpop.f32.mrf.mxu0
      %v1441 = vadd.f32 0.0, %v1440
      %v1442 = vpop.f32.mrf.mxu0
      %v1443 = vpop.f32.mrf.mxu0
      %v1444 = vadd.f32 0.0, %v1443
      %v1445 = vpop.f32.mrf.mxu0
      %1446 = vmatprep.mubr.bf16.mxu0 0
      %1447 = vmatmul.mubr.bf16.gmra.mxu0 %v1349
      %v1448 = vpop.f32.mrf.mxu0
      %v1449 = vadd.f32 0.0, %v1448
      %v1450 = vpop.f32.mrf.mxu0
      %v1451 = vpop.f32.mrf.mxu0
      %v1452 = vadd.f32 0.0, %v1451
      %v1453 = vpop.f32.mrf.mxu0
      %1454 = vmatprep.mubr.bf16.mxu0 0
      %1455 = vmatmul.mubr.bf16.gmra.mxu0 %v1352
      %v1456 = vpop.f32.mrf.mxu0
      %v1457 = vadd.f32 0.0, %v1456
      %v1458 = vpop.f32.mrf.mxu0
      %v1459 = vpop.f32.mrf.mxu0
      %v1460 = vadd.f32 0.0, %v1459
      %v1461 = vpop.f32.mrf.mxu0
      %1462 = vmatprep.mubr.bf16.mxu0 0
      %1463 = vmatmul.mubr.bf16.gmra.mxu0 %v1355
      %v1464 = vpop.f32.mrf.mxu0
      %v1465 = vadd.f32 0.0, %v1464
      %v1466 = vpop.f32.mrf.mxu0
      %v1467 = vpop.f32.mrf.mxu0
      %v1468 = vadd.f32 0.0, %v1467
      %v1469 = vpop.f32.mrf.mxu0
      %1470 = vmatprep.mubr.bf16.mxu0 0
      %1471 = vmatmul.mubr.bf16.gmra.mxu0 %v1358
      %v1472 = vpop.f32.mrf.mxu0
      %v1473 = vadd.f32 0.0, %v1472
      %v1474 = vpop.f32.mrf.mxu0
      %v1475 = vpop.f32.mrf.mxu0
      %v1476 = vadd.f32 0.0, %v1475
      %v1477 = vpop.f32.mrf.mxu0
      %1478 = vmatprep.mubr.bf16.mxu0 0
      %1479 = vmatmul.mubr.bf16.gmra.mxu0 %v1361
      %v1480 = vpop.f32.mrf.mxu0
      %v1481 = vadd.f32 0.0, %v1480
      %v1482 = vpop.f32.mrf.mxu0
      %v1483 = vpop.f32.mrf.mxu0
      %v1484 = vadd.f32 0.0, %v1483
      %v1485 = vpop.f32.mrf.mxu0
      %1486 = vmatprep.mubr.bf16.mxu0 0
      %1487 = vmatmul.mubr.bf16.gmra.mxu0 %v1364
      %v1488 = vpop.f32.mrf.mxu0
      %v1489 = vadd.f32 0.0, %v1488
      %v1490 = vpop.f32.mrf.mxu0
      %v1491 = vpop.f32.mrf.mxu0
      %v1492 = vadd.f32 0.0, %v1491
      %v1493 = vpop.f32.mrf.mxu0
      %1494 = vmatprep.mubr.bf16.mxu0 0
      %1495 = vmatmul.mubr.bf16.gmra.mxu0 %v1367
      %v1496 = vpop.f32.mrf.mxu0
      %v1497 = vadd.f32 0.0, %v1496
      %v1498 = vpop.f32.mrf.mxu0
      %v1499 = vpop.f32.mrf.mxu0
      %v1500 = vadd.f32 0.0, %v1499
      %v1501 = vpop.f32.mrf.mxu0
      %1502 = vmatprep.mubr.bf16.mxu0 0
      %1503 = vmatmul.mubr.bf16.gmra.mxu0 %v1370
      %v1504 = vpop.f32.mrf.mxu0
      %v1505 = vadd.f32 0.0, %v1504
      %v1506 = vpop.f32.mrf.mxu0
      %v1507 = vpop.f32.mrf.mxu0
      %v1508 = vadd.f32 0.0, %v1507
      %v1509 = vpop.f32.mrf.mxu0
      %1510 = vmatprep.mubr.bf16.mxu0 0
      %1511 = vmatmul.mubr.bf16.gmra.mxu0 %v1373
      %v1512 = vpop.f32.mrf.mxu0
      %v1513 = vadd.f32 0.0, %v1512
      %v1514 = vpop.f32.mrf.mxu0
      %v1515 = vpop.f32.mrf.mxu0
      %v1516 = vadd.f32 0.0, %v1515
      %v1517 = vpop.f32.mrf.mxu0
      %1518 = vmatprep.mubr.bf16.mxu0 0
      %1519 = vmatmul.mubr.bf16.gmra.mxu0 %v1376
      %v1520 = vpop.f32.mrf.mxu0
      %v1521 = vadd.f32 0.0, %v1520
      %v1522 = vpop.f32.mrf.mxu0
      %v1523 = vpop.f32.mrf.mxu0
      %v1524 = vadd.f32 0.0, %v1523
      %v1525 = vpop.f32.mrf.mxu0
      %1526 = vmatprep.mubr.bf16.mxu0 0
      %1527 = vmatmul.mubr.bf16.gmra.mxu0 %v1379
      %v1528 = vpop.f32.mrf.mxu0
      %v1529 = vadd.f32 0.0, %v1528
      %v1530 = vpop.f32.mrf.mxu0
      %v1531 = vpop.f32.mrf.mxu0
      %v1532 = vadd.f32 0.0, %v1531
      %v1533 = vpop.f32.mrf.mxu0
      %1534 = vmatprep.mubr.bf16.mxu0 0
      %1535 = vmatmul.mubr.bf16.gmra.mxu0 %v1382
      %v1536 = vpop.f32.mrf.mxu0
      %v1537 = vadd.f32 0.0, %v1536
      %v1538 = vpop.f32.mrf.mxu0
      %v1539 = vpop.f32.mrf.mxu0
      %v1540 = vadd.f32 0.0, %v1539
      %v1541 = vpop.f32.mrf.mxu0
      %1542 = vmatprep.mubr.bf16.mxu0 0
      %1543 = vmatmul.mubr.bf16.gmra.mxu0 %v1385
      %v1544 = vpop.f32.mrf.mxu0
      %v1545 = vadd.f32 0.0, %v1544
      %v1546 = vpop.f32.mrf.mxu0
      %v1547 = vpop.f32.mrf.mxu0
      %v1548 = vadd.f32 0.0, %v1547
      %v1549 = vpop.f32.mrf.mxu0
      %1550 = vdwg.mxu0
      %v1551 = vadd.f32 %v1082, %v1425
      %v1552 = vadd.f32 %v1085, %v1428
      %v1553 = vadd.f32 %v1090, %v1433
      %v1554 = vadd.f32 %v1093, %v1436
      %v1555 = vadd.f32 %v1098, %v1441
      %v1556 = vadd.f32 %v1101, %v1444
      %v1557 = vadd.f32 %v1106, %v1449
      %v1558 = vadd.f32 %v1109, %v1452
      %v1559 = vadd.f32 %v1114, %v1457
      %v1560 = vadd.f32 %v1117, %v1460
      %v1561 = vadd.f32 %v1122, %v1465
      %v1562 = vadd.f32 %v1125, %v1468
      %v1563 = vadd.f32 %v1130, %v1473
      %v1564 = vadd.f32 %v1133, %v1476
      %v1565 = vadd.f32 %v1138, %v1481
      %v1566 = vadd.f32 %v1141, %v1484
      %v1567 = vadd.f32 %v1146, %v1489
      %v1568 = vadd.f32 %v1149, %v1492
      %v1569 = vadd.f32 %v1154, %v1497
      %v1570 = vadd.f32 %v1157, %v1500
      %v1571 = vadd.f32 %v1162, %v1505
      %v1572 = vadd.f32 %v1165, %v1508
      %v1573 = vadd.f32 %v1170, %v1513
      %v1574 = vadd.f32 %v1173, %v1516
      %v1575 = vadd.f32 %v1178, %v1521
      %v1576 = vadd.f32 %v1181, %v1524
      %v1577 = vadd.f32 %v1186, %v1529
      %v1578 = vadd.f32 %v1189, %v1532
      %v1579 = vadd.f32 %v1194, %v1537
      %v1580 = vadd.f32 %v1197, %v1540
      %v1581 = vadd.f32 %v1202, %v1545
      %v1582 = vadd.f32 %v1205, %v1548
      %v1583 = vpack.c.bf16 %v581, %v580
      %s1584 = scalar_lea.vmem %s269, 3
      %v1585 = vld [vmem:[%s1584] sm:$0x1]
      %v1587 = vsel %vm782, %v1583, 0
      %v1590 = vsel %vm831, %v1585, 0
      %1592 = vmatprep.subr.bf16.mxu0 0
      %1593 = vmatpush1.bf16.msra.mxu0 0
      %1594 = vmatprep.subr.bf16.mxu0 0
      %1595 = vmatpush1.bf16.msra.mxu0 0
      %1596 = vmatprep.subr.bf16.mxu0 0
      %1597 = vmatpush1.bf16.msra.mxu0 0
      %1598 = vmatprep.subr.bf16.mxu0 0
      %1599 = vmatpush1.bf16.msra.mxu0 0
      %1600 = vmatprep.subr.bf16.mxu0 0
      %1601 = vmatpush1.bf16.msra.mxu0 0
      %1602 = vmatprep.subr.bf16.mxu0 0
      %1603 = vmatpush1.bf16.msra.mxu0 0
      %1604 = vmatprep.subr.bf16.mxu0 0
      %1605 = vmatpush1.bf16.msra.mxu0 0
      %1606 = vmatprep.subr.bf16.mxu0 0
      %1607 = vmatpush1.bf16.msra.mxu0 %v1590
      %1608 = vmatprep.subr.bf16.mxu0 0
      %1609 = vmatpush2.bf16.msra.mxu0 0
      %1610 = vmatprep.subr.bf16.mxu0 0
      %1611 = vmatpush2.bf16.msra.mxu0 0
      %1612 = vmatprep.subr.bf16.mxu0 0
      %1613 = vmatpush2.bf16.msra.mxu0 0
      %1614 = vmatprep.subr.bf16.mxu0 0
      %1615 = vmatpush2.bf16.msra.mxu0 0
      %1616 = vmatprep.subr.bf16.mxu0 0
      %1617 = vmatpush2.bf16.msra.mxu0 0
      %1618 = vmatprep.subr.bf16.mxu0 0
      %1619 = vmatpush2.bf16.msra.mxu0 0
      %1620 = vmatprep.subr.bf16.mxu0 0
      %1621 = vmatpush2.bf16.msra.mxu0 0
      %1622 = vmatprep.subr.bf16.mxu0 0
      %1623 = vmatpush2.bf16.msra.mxu0 0
      %1624 = vmatprep.mubr.bf16.mxu0 0
      %1625 = vmatmul.mubr.bf16.gmra.mxu0 %v1000
      %v1626 = vpop.f32.mrf.mxu0
      %v1627 = vadd.f32 0.0, %v1626
      %v1628 = vpop.f32.mrf.mxu0
      %v1629 = vpop.f32.mrf.mxu0
      %v1630 = vadd.f32 0.0, %v1629
      %v1631 = vpop.f32.mrf.mxu0
      %1632 = vmatprep.mubr.bf16.mxu0 0
      %1633 = vmatmul.mubr.bf16.gmra.mxu0 %v1003
      %v1634 = vpop.f32.mrf.mxu0
      %v1635 = vadd.f32 0.0, %v1634
      %v1636 = vpop.f32.mrf.mxu0
      %v1637 = vpop.f32.mrf.mxu0
      %v1638 = vadd.f32 0.0, %v1637
      %v1639 = vpop.f32.mrf.mxu0
      %1640 = vmatprep.mubr.bf16.mxu0 0
      %1641 = vmatmul.mubr.bf16.gmra.mxu0 %v1006
      %v1642 = vpop.f32.mrf.mxu0
      %v1643 = vadd.f32 0.0, %v1642
      %v1644 = vpop.f32.mrf.mxu0
      %v1645 = vpop.f32.mrf.mxu0
      %v1646 = vadd.f32 0.0, %v1645
      %v1647 = vpop.f32.mrf.mxu0
      %1648 = vmatprep.mubr.bf16.mxu0 0
      %1649 = vmatmul.mubr.bf16.gmra.mxu0 %v1009
      %v1650 = vpop.f32.mrf.mxu0
      %v1651 = vadd.f32 0.0, %v1650
      %v1652 = vpop.f32.mrf.mxu0
      %v1653 = vpop.f32.mrf.mxu0
      %v1654 = vadd.f32 0.0, %v1653
      %v1655 = vpop.f32.mrf.mxu0
      %1656 = vmatprep.mubr.bf16.mxu0 0
      %1657 = vmatmul.mubr.bf16.gmra.mxu0 %v1012
      %v1658 = vpop.f32.mrf.mxu0
      %v1659 = vadd.f32 0.0, %v1658
      %v1660 = vpop.f32.mrf.mxu0
      %v1661 = vpop.f32.mrf.mxu0
      %v1662 = vadd.f32 0.0, %v1661
      %v1663 = vpop.f32.mrf.mxu0
      %1664 = vmatprep.mubr.bf16.mxu0 0
      %1665 = vmatmul.mubr.bf16.gmra.mxu0 %v1015
      %v1666 = vpop.f32.mrf.mxu0
      %v1667 = vadd.f32 0.0, %v1666
      %v1668 = vpop.f32.mrf.mxu0
      %v1669 = vpop.f32.mrf.mxu0
      %v1670 = vadd.f32 0.0, %v1669
      %v1671 = vpop.f32.mrf.mxu0
      %1672 = vmatprep.mubr.bf16.mxu0 0
      %1673 = vmatmul.mubr.bf16.gmra.mxu0 %v1018
      %v1674 = vpop.f32.mrf.mxu0
      %v1675 = vadd.f32 0.0, %v1674
      %v1676 = vpop.f32.mrf.mxu0
      %v1677 = vpop.f32.mrf.mxu0
      %v1678 = vadd.f32 0.0, %v1677
      %v1679 = vpop.f32.mrf.mxu0
      %1680 = vmatprep.mubr.bf16.mxu0 0
      %1681 = vmatmul.mubr.bf16.gmra.mxu0 %v1021
      %v1682 = vpop.f32.mrf.mxu0
      %v1683 = vadd.f32 0.0, %v1682
      %v1684 = vpop.f32.mrf.mxu0
      %v1685 = vpop.f32.mrf.mxu0
      %v1686 = vadd.f32 0.0, %v1685
      %v1687 = vpop.f32.mrf.mxu0
      %1688 = vmatprep.mubr.bf16.mxu0 0
      %1689 = vmatmul.mubr.bf16.gmra.mxu0 %v1024
      %v1690 = vpop.f32.mrf.mxu0
      %v1691 = vadd.f32 0.0, %v1690
      %v1692 = vpop.f32.mrf.mxu0
      %v1693 = vpop.f32.mrf.mxu0
      %v1694 = vadd.f32 0.0, %v1693
      %v1695 = vpop.f32.mrf.mxu0
      %1696 = vmatprep.mubr.bf16.mxu0 0
      %1697 = vmatmul.mubr.bf16.gmra.mxu0 %v1027
      %v1698 = vpop.f32.mrf.mxu0
      %v1699 = vadd.f32 0.0, %v1698
      %v1700 = vpop.f32.mrf.mxu0
      %v1701 = vpop.f32.mrf.mxu0
      %v1702 = vadd.f32 0.0, %v1701
      %v1703 = vpop.f32.mrf.mxu0
      %1704 = vmatprep.mubr.bf16.mxu0 0
      %1705 = vmatmul.mubr.bf16.gmra.mxu0 %v1030
      %v1706 = vpop.f32.mrf.mxu0
      %v1707 = vadd.f32 0.0, %v1706
      %v1708 = vpop.f32.mrf.mxu0
      %v1709 = vpop.f32.mrf.mxu0
      %v1710 = vadd.f32 0.0, %v1709
      %v1711 = vpop.f32.mrf.mxu0
      %1712 = vmatprep.mubr.bf16.mxu0 0
      %1713 = vmatmul.mubr.bf16.gmra.mxu0 %v1033
      %v1714 = vpop.f32.mrf.mxu0
      %v1715 = vadd.f32 0.0, %v1714
      %v1716 = vpop.f32.mrf.mxu0
      %v1717 = vpop.f32.mrf.mxu0
      %v1718 = vadd.f32 0.0, %v1717
      %v1719 = vpop.f32.mrf.mxu0
      %1720 = vmatprep.mubr.bf16.mxu0 0
      %1721 = vmatmul.mubr.bf16.gmra.mxu0 %v1036
      %v1722 = vpop.f32.mrf.mxu0
      %v1723 = vadd.f32 0.0, %v1722
      %v1724 = vpop.f32.mrf.mxu0
      %v1725 = vpop.f32.mrf.mxu0
      %v1726 = vadd.f32 0.0, %v1725
      %v1727 = vpop.f32.mrf.mxu0
      %1728 = vmatprep.mubr.bf16.mxu0 0
      %1729 = vmatmul.mubr.bf16.gmra.mxu0 %v1039
      %v1730 = vpop.f32.mrf.mxu0
      %v1731 = vadd.f32 0.0, %v1730
      %v1732 = vpop.f32.mrf.mxu0
      %v1733 = vpop.f32.mrf.mxu0
      %v1734 = vadd.f32 0.0, %v1733
      %v1735 = vpop.f32.mrf.mxu0
      %1736 = vmatprep.mubr.bf16.mxu0 0
      %1737 = vmatmul.mubr.bf16.gmra.mxu0 %v1042
      %v1738 = vpop.f32.mrf.mxu0
      %v1739 = vadd.f32 0.0, %v1738
      %v1740 = vpop.f32.mrf.mxu0
      %v1741 = vpop.f32.mrf.mxu0
      %v1742 = vadd.f32 0.0, %v1741
      %v1743 = vpop.f32.mrf.mxu0
      %1744 = vmatprep.mubr.bf16.mxu0 0
      %1745 = vmatmul.mubr.bf16.gmra.mxu0 %v1587
      %v1746 = vpop.f32.mrf.mxu0
      %v1747 = vadd.f32 0.0, %v1746
      %v1748 = vpop.f32.mrf.mxu0
      %v1749 = vpop.f32.mrf.mxu0
      %v1750 = vadd.f32 0.0, %v1749
      %v1751 = vpop.f32.mrf.mxu0
      %1752 = vdwg.mxu0
      %v1753 = vadd.f32 %v1551, %v1627
      %v1754 = vadd.f32 %v1552, %v1630
      %v1755 = vadd.f32 %v1553, %v1635
      %v1756 = vadd.f32 %v1554, %v1638
      %v1757 = vadd.f32 %v1555, %v1643
      %v1758 = vadd.f32 %v1556, %v1646
      %v1759 = vadd.f32 %v1557, %v1651
      %v1760 = vadd.f32 %v1558, %v1654
      %v1761 = vadd.f32 %v1559, %v1659
      %v1762 = vadd.f32 %v1560, %v1662
      %v1763 = vadd.f32 %v1561, %v1667
      %v1764 = vadd.f32 %v1562, %v1670
      %v1765 = vadd.f32 %v1563, %v1675
      %v1766 = vadd.f32 %v1564, %v1678
      %v1767 = vadd.f32 %v1565, %v1683
      %v1768 = vadd.f32 %v1566, %v1686
      %v1769 = vadd.f32 %v1567, %v1691
      %v1770 = vadd.f32 %v1568, %v1694
      %v1771 = vadd.f32 %v1569, %v1699
      %v1772 = vadd.f32 %v1570, %v1702
      %v1773 = vadd.f32 %v1571, %v1707
      %v1774 = vadd.f32 %v1572, %v1710
      %v1775 = vadd.f32 %v1573, %v1715
      %v1776 = vadd.f32 %v1574, %v1718
      %v1777 = vadd.f32 %v1575, %v1723
      %v1778 = vadd.f32 %v1576, %v1726
      %v1779 = vadd.f32 %v1577, %v1731
      %v1780 = vadd.f32 %v1578, %v1734
      %v1781 = vadd.f32 %v1579, %v1739
      %v1782 = vadd.f32 %v1580, %v1742
      %v1783 = vadd.f32 %v1581, %v1747
      %v1784 = vadd.f32 %v1582, %v1750
      %v1788 = vrot.slane %v580, 1
      %v1789 = vrot.slane %v581, 1
      %v1790 = vsel %vm651, %v1788, %v1789
      %v1791 = vrot.slane %v582, 1
      %v1792 = vsel %vm651, %v1789, %v1791
      %v1795 = vpack.c.bf16 %v1792, %v1790
      %s1796 = scalar_lea.vmem %s269, 4
      %v1797 = vld [vmem:[%s1796] sm:$0x1]
      %v1799 = vsel %vm782, %v1795, 0
      %v1802 = vsel %vm831, %v1797, 0
      %1804 = vmatprep.subr.bf16.mxu0 0
      %1805 = vmatpush1.bf16.msra.mxu0 0
      %1806 = vmatprep.subr.bf16.mxu0 0
      %1807 = vmatpush1.bf16.msra.mxu0 0
      %1808 = vmatprep.subr.bf16.mxu0 0
      %1809 = vmatpush1.bf16.msra.mxu0 0
      %1810 = vmatprep.subr.bf16.mxu0 0
      %1811 = vmatpush1.bf16.msra.mxu0 0
      %1812 = vmatprep.subr.bf16.mxu0 0
      %1813 = vmatpush1.bf16.msra.mxu0 0
      %1814 = vmatprep.subr.bf16.mxu0 0
      %1815 = vmatpush1.bf16.msra.mxu0 0
      %1816 = vmatprep.subr.bf16.mxu0 0
      %1817 = vmatpush1.bf16.msra.mxu0 0
      %1818 = vmatprep.subr.bf16.mxu0 0
      %1819 = vmatpush1.bf16.msra.mxu0 %v1802
      %1820 = vmatprep.subr.bf16.mxu0 0
      %1821 = vmatpush2.bf16.msra.mxu0 0
      %1822 = vmatprep.subr.bf16.mxu0 0
      %1823 = vmatpush2.bf16.msra.mxu0 0
      %1824 = vmatprep.subr.bf16.mxu0 0
      %1825 = vmatpush2.bf16.msra.mxu0 0
      %1826 = vmatprep.subr.bf16.mxu0 0
      %1827 = vmatpush2.bf16.msra.mxu0 0
      %1828 = vmatprep.subr.bf16.mxu0 0
      %1829 = vmatpush2.bf16.msra.mxu0 0
      %1830 = vmatprep.subr.bf16.mxu0 0
      %1831 = vmatpush2.bf16.msra.mxu0 0
      %1832 = vmatprep.subr.bf16.mxu0 0
      %1833 = vmatpush2.bf16.msra.mxu0 0
      %1834 = vmatprep.subr.bf16.mxu0 0
      %1835 = vmatpush2.bf16.msra.mxu0 0
      %1836 = vmatprep.mubr.bf16.mxu0 0
      %1837 = vmatmul.mubr.bf16.gmra.mxu0 %v787
      %v1838 = vpop.f32.mrf.mxu0
      %v1839 = vadd.f32 0.0, %v1838
      %v1840 = vpop.f32.mrf.mxu0
      %v1841 = vpop.f32.mrf.mxu0
      %v1842 = vadd.f32 0.0, %v1841
      %v1843 = vpop.f32.mrf.mxu0
      %1844 = vmatprep.mubr.bf16.mxu0 0
      %1845 = vmatmul.mubr.bf16.gmra.mxu0 %v790
      %v1846 = vpop.f32.mrf.mxu0
      %v1847 = vadd.f32 0.0, %v1846
      %v1848 = vpop.f32.mrf.mxu0
      %v1849 = vpop.f32.mrf.mxu0
      %v1850 = vadd.f32 0.0, %v1849
      %v1851 = vpop.f32.mrf.mxu0
      %1852 = vmatprep.mubr.bf16.mxu0 0
      %1853 = vmatmul.mubr.bf16.gmra.mxu0 %v793
      %v1854 = vpop.f32.mrf.mxu0
      %v1855 = vadd.f32 0.0, %v1854
      %v1856 = vpop.f32.mrf.mxu0
      %v1857 = vpop.f32.mrf.mxu0
      %v1858 = vadd.f32 0.0, %v1857
      %v1859 = vpop.f32.mrf.mxu0
      %1860 = vmatprep.mubr.bf16.mxu0 0
      %1861 = vmatmul.mubr.bf16.gmra.mxu0 %v796
      %v1862 = vpop.f32.mrf.mxu0
      %v1863 = vadd.f32 0.0, %v1862
      %v1864 = vpop.f32.mrf.mxu0
      %v1865 = vpop.f32.mrf.mxu0
      %v1866 = vadd.f32 0.0, %v1865
      %v1867 = vpop.f32.mrf.mxu0
      %1868 = vmatprep.mubr.bf16.mxu0 0
      %1869 = vmatmul.mubr.bf16.gmra.mxu0 %v799
      %v1870 = vpop.f32.mrf.mxu0
      %v1871 = vadd.f32 0.0, %v1870
      %v1872 = vpop.f32.mrf.mxu0
      %v1873 = vpop.f32.mrf.mxu0
      %v1874 = vadd.f32 0.0, %v1873
      %v1875 = vpop.f32.mrf.mxu0
      %1876 = vmatprep.mubr.bf16.mxu0 0
      %1877 = vmatmul.mubr.bf16.gmra.mxu0 %v802
      %v1878 = vpop.f32.mrf.mxu0
      %v1879 = vadd.f32 0.0, %v1878
      %v1880 = vpop.f32.mrf.mxu0
      %v1881 = vpop.f32.mrf.mxu0
      %v1882 = vadd.f32 0.0, %v1881
      %v1883 = vpop.f32.mrf.mxu0
      %1884 = vmatprep.mubr.bf16.mxu0 0
      %1885 = vmatmul.mubr.bf16.gmra.mxu0 %v805
      %v1886 = vpop.f32.mrf.mxu0
      %v1887 = vadd.f32 0.0, %v1886
      %v1888 = vpop.f32.mrf.mxu0
      %v1889 = vpop.f32.mrf.mxu0
      %v1890 = vadd.f32 0.0, %v1889
      %v1891 = vpop.f32.mrf.mxu0
      %1892 = vmatprep.mubr.bf16.mxu0 0
      %1893 = vmatmul.mubr.bf16.gmra.mxu0 %v808
      %v1894 = vpop.f32.mrf.mxu0
      %v1895 = vadd.f32 0.0, %v1894
      %v1896 = vpop.f32.mrf.mxu0
      %v1897 = vpop.f32.mrf.mxu0
      %v1898 = vadd.f32 0.0, %v1897
      %v1899 = vpop.f32.mrf.mxu0
      %1900 = vmatprep.mubr.bf16.mxu0 0
      %1901 = vmatmul.mubr.bf16.gmra.mxu0 %v811
      %v1902 = vpop.f32.mrf.mxu0
      %v1903 = vadd.f32 0.0, %v1902
      %v1904 = vpop.f32.mrf.mxu0
      %v1905 = vpop.f32.mrf.mxu0
      %v1906 = vadd.f32 0.0, %v1905
      %v1907 = vpop.f32.mrf.mxu0
      %1908 = vmatprep.mubr.bf16.mxu0 0
      %1909 = vmatmul.mubr.bf16.gmra.mxu0 %v814
      %v1910 = vpop.f32.mrf.mxu0
      %v1911 = vadd.f32 0.0, %v1910
      %v1912 = vpop.f32.mrf.mxu0
      %v1913 = vpop.f32.mrf.mxu0
      %v1914 = vadd.f32 0.0, %v1913
      %v1915 = vpop.f32.mrf.mxu0
      %1916 = vmatprep.mubr.bf16.mxu0 0
      %1917 = vmatmul.mubr.bf16.gmra.mxu0 %v817
      %v1918 = vpop.f32.mrf.mxu0
      %v1919 = vadd.f32 0.0, %v1918
      %v1920 = vpop.f32.mrf.mxu0
      %v1921 = vpop.f32.mrf.mxu0
      %v1922 = vadd.f32 0.0, %v1921
      %v1923 = vpop.f32.mrf.mxu0
      %1924 = vmatprep.mubr.bf16.mxu0 0
      %1925 = vmatmul.mubr.bf16.gmra.mxu0 %v820
      %v1926 = vpop.f32.mrf.mxu0
      %v1927 = vadd.f32 0.0, %v1926
      %v1928 = vpop.f32.mrf.mxu0
      %v1929 = vpop.f32.mrf.mxu0
      %v1930 = vadd.f32 0.0, %v1929
      %v1931 = vpop.f32.mrf.mxu0
      %1932 = vmatprep.mubr.bf16.mxu0 0
      %1933 = vmatmul.mubr.bf16.gmra.mxu0 %v823
      %v1934 = vpop.f32.mrf.mxu0
      %v1935 = vadd.f32 0.0, %v1934
      %v1936 = vpop.f32.mrf.mxu0
      %v1937 = vpop.f32.mrf.mxu0
      %v1938 = vadd.f32 0.0, %v1937
      %v1939 = vpop.f32.mrf.mxu0
      %1940 = vmatprep.mubr.bf16.mxu0 0
      %1941 = vmatmul.mubr.bf16.gmra.mxu0 %v826
      %v1942 = vpop.f32.mrf.mxu0
      %v1943 = vadd.f32 0.0, %v1942
      %v1944 = vpop.f32.mrf.mxu0
      %v1945 = vpop.f32.mrf.mxu0
      %v1946 = vadd.f32 0.0, %v1945
      %v1947 = vpop.f32.mrf.mxu0
      %1948 = vmatprep.mubr.bf16.mxu0 0
      %1949 = vmatmul.mubr.bf16.gmra.mxu0 %v829
      %v1950 = vpop.f32.mrf.mxu0
      %v1951 = vadd.f32 0.0, %v1950
      %v1952 = vpop.f32.mrf.mxu0
      %v1953 = vpop.f32.mrf.mxu0
      %v1954 = vadd.f32 0.0, %v1953
      %v1955 = vpop.f32.mrf.mxu0
      %1956 = vmatprep.mubr.bf16.mxu0 0
      %1957 = vmatmul.mubr.bf16.gmra.mxu0 %v1799
      %v1958 = vpop.f32.mrf.mxu0
      %v1959 = vadd.f32 0.0, %v1958
      %v1960 = vpop.f32.mrf.mxu0
      %v1961 = vpop.f32.mrf.mxu0
      %v1962 = vadd.f32 0.0, %v1961
      %v1963 = vpop.f32.mrf.mxu0
      %1964 = vdwg.mxu0
      %v1965 = vadd.f32 %v1753, %v1839
      %v1966 = vadd.f32 %v1754, %v1842
      %v1967 = vadd.f32 %v1755, %v1847
      %v1968 = vadd.f32 %v1756, %v1850
      %v1969 = vadd.f32 %v1757, %v1855
      %v1970 = vadd.f32 %v1758, %v1858
      %v1971 = vadd.f32 %v1759, %v1863
      %v1972 = vadd.f32 %v1760, %v1866
      %v1973 = vadd.f32 %v1761, %v1871
      %v1974 = vadd.f32 %v1762, %v1874
      %v1975 = vadd.f32 %v1763, %v1879
      %v1976 = vadd.f32 %v1764, %v1882
      %v1977 = vadd.f32 %v1765, %v1887
      %v1978 = vadd.f32 %v1766, %v1890
      %v1979 = vadd.f32 %v1767, %v1895
      %v1980 = vadd.f32 %v1768, %v1898
      %v1981 = vadd.f32 %v1769, %v1903
      %v1982 = vadd.f32 %v1770, %v1906
      %v1983 = vadd.f32 %v1771, %v1911
      %v1984 = vadd.f32 %v1772, %v1914
      %v1985 = vadd.f32 %v1773, %v1919
      %v1986 = vadd.f32 %v1774, %v1922
      %v1987 = vadd.f32 %v1775, %v1927
      %v1988 = vadd.f32 %v1776, %v1930
      %v1989 = vadd.f32 %v1777, %v1935
      %v1990 = vadd.f32 %v1778, %v1938
      %v1991 = vadd.f32 %v1779, %v1943
      %v1992 = vadd.f32 %v1780, %v1946
      %v1993 = vadd.f32 %v1781, %v1951
      %v1994 = vadd.f32 %v1782, %v1954
      %v1995 = vadd.f32 %v1783, %v1959
      %v1996 = vadd.f32 %v1784, %v1962
      %v1997 = vrot.slane %v580, 2
      %v1998 = vrot.slane %v581, 2
      %v1999 = vsel %vm1208, %v1997, %v1998
      %v2000 = vrot.slane %v582, 2
      %v2001 = vsel %vm1208, %v1998, %v2000
      %v2004 = vpack.c.bf16 %v2001, %v1999
      %s2005 = scalar_lea.vmem %s269, 5
      %v2006 = vld [vmem:[%s2005] sm:$0x1]
      %v2008 = vsel %vm782, %v2004, 0
      %v2011 = vsel %vm831, %v2006, 0
      %2013 = vmatprep.subr.bf16.mxu0 0
      %2014 = vmatpush1.bf16.msra.mxu0 0
      %2015 = vmatprep.subr.bf16.mxu0 0
      %2016 = vmatpush1.bf16.msra.mxu0 0
      %2017 = vmatprep.subr.bf16.mxu0 0
      %2018 = vmatpush1.bf16.msra.mxu0 0
      %2019 = vmatprep.subr.bf16.mxu0 0
      %2020 = vmatpush1.bf16.msra.mxu0 0
      %2021 = vmatprep.subr.bf16.mxu0 0
      %2022 = vmatpush1.bf16.msra.mxu0 0
      %2023 = vmatprep.subr.bf16.mxu0 0
      %2024 = vmatpush1.bf16.msra.mxu0 0
      %2025 = vmatprep.subr.bf16.mxu0 0
      %2026 = vmatpush1.bf16.msra.mxu0 0
      %2027 = vmatprep.subr.bf16.mxu0 0
      %2028 = vmatpush1.bf16.msra.mxu0 %v2011
      %2029 = vmatprep.subr.bf16.mxu0 0
      %2030 = vmatpush2.bf16.msra.mxu0 0
      %2031 = vmatprep.subr.bf16.mxu0 0
      %2032 = vmatpush2.bf16.msra.mxu0 0
      %2033 = vmatprep.subr.bf16.mxu0 0
      %2034 = vmatpush2.bf16.msra.mxu0 0
      %2035 = vmatprep.subr.bf16.mxu0 0
      %2036 = vmatpush2.bf16.msra.mxu0 0
      %2037 = vmatprep.subr.bf16.mxu0 0
      %2038 = vmatpush2.bf16.msra.mxu0 0
      %2039 = vmatprep.subr.bf16.mxu0 0
      %2040 = vmatpush2.bf16.msra.mxu0 0
      %2041 = vmatprep.subr.bf16.mxu0 0
      %2042 = vmatpush2.bf16.msra.mxu0 0
      %2043 = vmatprep.subr.bf16.mxu0 0
      %2044 = vmatpush2.bf16.msra.mxu0 0
      %2045 = vmatprep.mubr.bf16.mxu0 0
      %2046 = vmatmul.mubr.bf16.gmra.mxu0 %v1343
      %v2047 = vpop.f32.mrf.mxu0
      %v2048 = vadd.f32 0.0, %v2047
      %v2049 = vpop.f32.mrf.mxu0
      %v2050 = vpop.f32.mrf.mxu0
      %v2051 = vadd.f32 0.0, %v2050
      %v2052 = vpop.f32.mrf.mxu0
      %2053 = vmatprep.mubr.bf16.mxu0 0
      %2054 = vmatmul.mubr.bf16.gmra.mxu0 %v1346
      %v2055 = vpop.f32.mrf.mxu0
      %v2056 = vadd.f32 0.0, %v2055
      %v2057 = vpop.f32.mrf.mxu0
      %v2058 = vpop.f32.mrf.mxu0
      %v2059 = vadd.f32 0.0, %v2058
      %v2060 = vpop.f32.mrf.mxu0
      %2061 = vmatprep.mubr.bf16.mxu0 0
      %2062 = vmatmul.mubr.bf16.gmra.mxu0 %v1349
      %v2063 = vpop.f32.mrf.mxu0
      %v2064 = vadd.f32 0.0, %v2063
      %v2065 = vpop.f32.mrf.mxu0
      %v2066 = vpop.f32.mrf.mxu0
      %v2067 = vadd.f32 0.0, %v2066
      %v2068 = vpop.f32.mrf.mxu0
      %2069 = vmatprep.mubr.bf16.mxu0 0
      %2070 = vmatmul.mubr.bf16.gmra.mxu0 %v1352
      %v2071 = vpop.f32.mrf.mxu0
      %v2072 = vadd.f32 0.0, %v2071
      %v2073 = vpop.f32.mrf.mxu0
      %v2074 = vpop.f32.mrf.mxu0
      %v2075 = vadd.f32 0.0, %v2074
      %v2076 = vpop.f32.mrf.mxu0
      %2077 = vmatprep.mubr.bf16.mxu0 0
      %2078 = vmatmul.mubr.bf16.gmra.mxu0 %v1355
      %v2079 = vpop.f32.mrf.mxu0
      %v2080 = vadd.f32 0.0, %v2079
      %v2081 = vpop.f32.mrf.mxu0
      %v2082 = vpop.f32.mrf.mxu0
      %v2083 = vadd.f32 0.0, %v2082
      %v2084 = vpop.f32.mrf.mxu0
      %2085 = vmatprep.mubr.bf16.mxu0 0
      %2086 = vmatmul.mubr.bf16.gmra.mxu0 %v1358
      %v2087 = vpop.f32.mrf.mxu0
      %v2088 = vadd.f32 0.0, %v2087
      %v2089 = vpop.f32.mrf.mxu0
      %v2090 = vpop.f32.mrf.mxu0
      %v2091 = vadd.f32 0.0, %v2090
      %v2092 = vpop.f32.mrf.mxu0
      %2093 = vmatprep.mubr.bf16.mxu0 0
      %2094 = vmatmul.mubr.bf16.gmra.mxu0 %v1361
      %v2095 = vpop.f32.mrf.mxu0
      %v2096 = vadd.f32 0.0, %v2095
      %v2097 = vpop.f32.mrf.mxu0
      %v2098 = vpop.f32.mrf.mxu0
      %v2099 = vadd.f32 0.0, %v2098
      %v2100 = vpop.f32.mrf.mxu0
      %2101 = vmatprep.mubr.bf16.mxu0 0
      %2102 = vmatmul.mubr.bf16.gmra.mxu0 %v1364
      %v2103 = vpop.f32.mrf.mxu0
      %v2104 = vadd.f32 0.0, %v2103
      %v2105 = vpop.f32.mrf.mxu0
      %v2106 = vpop.f32.mrf.mxu0
      %v2107 = vadd.f32 0.0, %v2106
      %v2108 = vpop.f32.mrf.mxu0
      %2109 = vmatprep.mubr.bf16.mxu0 0
      %2110 = vmatmul.mubr.bf16.gmra.mxu0 %v1367
      %v2111 = vpop.f32.mrf.mxu0
      %v2112 = vadd.f32 0.0, %v2111
      %v2113 = vpop.f32.mrf.mxu0
      %v2114 = vpop.f32.mrf.mxu0
      %v2115 = vadd.f32 0.0, %v2114
      %v2116 = vpop.f32.mrf.mxu0
      %2117 = vmatprep.mubr.bf16.mxu0 0
      %2118 = vmatmul.mubr.bf16.gmra.mxu0 %v1370
      %v2119 = vpop.f32.mrf.mxu0
      %v2120 = vadd.f32 0.0, %v2119
      %v2121 = vpop.f32.mrf.mxu0
      %v2122 = vpop.f32.mrf.mxu0
      %v2123 = vadd.f32 0.0, %v2122
      %v2124 = vpop.f32.mrf.mxu0
      %2125 = vmatprep.mubr.bf16.mxu0 0
      %2126 = vmatmul.mubr.bf16.gmra.mxu0 %v1373
      %v2127 = vpop.f32.mrf.mxu0
      %v2128 = vadd.f32 0.0, %v2127
      %v2129 = vpop.f32.mrf.mxu0
      %v2130 = vpop.f32.mrf.mxu0
      %v2131 = vadd.f32 0.0, %v2130
      %v2132 = vpop.f32.mrf.mxu0
      %2133 = vmatprep.mubr.bf16.mxu0 0
      %2134 = vmatmul.mubr.bf16.gmra.mxu0 %v1376
      %v2135 = vpop.f32.mrf.mxu0
      %v2136 = vadd.f32 0.0, %v2135
      %v2137 = vpop.f32.mrf.mxu0
      %v2138 = vpop.f32.mrf.mxu0
      %v2139 = vadd.f32 0.0, %v2138
      %v2140 = vpop.f32.mrf.mxu0
      %2141 = vmatprep.mubr.bf16.mxu0 0
      %2142 = vmatmul.mubr.bf16.gmra.mxu0 %v1379
      %v2143 = vpop.f32.mrf.mxu0
      %v2144 = vadd.f32 0.0, %v2143
      %v2145 = vpop.f32.mrf.mxu0
      %v2146 = vpop.f32.mrf.mxu0
      %v2147 = vadd.f32 0.0, %v2146
      %v2148 = vpop.f32.mrf.mxu0
      %2149 = vmatprep.mubr.bf16.mxu0 0
      %2150 = vmatmul.mubr.bf16.gmra.mxu0 %v1382
      %v2151 = vpop.f32.mrf.mxu0
      %v2152 = vadd.f32 0.0, %v2151
      %v2153 = vpop.f32.mrf.mxu0
      %v2154 = vpop.f32.mrf.mxu0
      %v2155 = vadd.f32 0.0, %v2154
      %v2156 = vpop.f32.mrf.mxu0
      %2157 = vmatprep.mubr.bf16.mxu0 0
      %2158 = vmatmul.mubr.bf16.gmra.mxu0 %v1385
      %v2159 = vpop.f32.mrf.mxu0
      %v2160 = vadd.f32 0.0, %v2159
      %v2161 = vpop.f32.mrf.mxu0
      %v2162 = vpop.f32.mrf.mxu0
      %v2163 = vadd.f32 0.0, %v2162
      %v2164 = vpop.f32.mrf.mxu0
      %2165 = vmatprep.mubr.bf16.mxu0 0
      %2166 = vmatmul.mubr.bf16.gmra.mxu0 %v2008
      %v2167 = vpop.f32.mrf.mxu0
      %v2168 = vadd.f32 0.0, %v2167
      %v2169 = vpop.f32.mrf.mxu0
      %v2170 = vpop.f32.mrf.mxu0
      %v2171 = vadd.f32 0.0, %v2170
      %v2172 = vpop.f32.mrf.mxu0
      %2173 = vdwg.mxu0
      %v2174 = vadd.f32 %v1965, %v2048
      %v2175 = vadd.f32 %v1966, %v2051
      %v2176 = vadd.f32 %v1967, %v2056
      %v2177 = vadd.f32 %v1968, %v2059
      %v2178 = vadd.f32 %v1969, %v2064
      %v2179 = vadd.f32 %v1970, %v2067
      %v2180 = vadd.f32 %v1971, %v2072
      %v2181 = vadd.f32 %v1972, %v2075
      %v2182 = vadd.f32 %v1973, %v2080
      %v2183 = vadd.f32 %v1974, %v2083
      %v2184 = vadd.f32 %v1975, %v2088
      %v2185 = vadd.f32 %v1976, %v2091
      %v2186 = vadd.f32 %v1977, %v2096
      %v2187 = vadd.f32 %v1978, %v2099
      %v2188 = vadd.f32 %v1979, %v2104
      %v2189 = vadd.f32 %v1980, %v2107
      %v2190 = vadd.f32 %v1981, %v2112
      %v2191 = vadd.f32 %v1982, %v2115
      %v2192 = vadd.f32 %v1983, %v2120
      %v2193 = vadd.f32 %v1984, %v2123
      %v2194 = vadd.f32 %v1985, %v2128
      %v2195 = vadd.f32 %v1986, %v2131
      %v2196 = vadd.f32 %v1987, %v2136
      %v2197 = vadd.f32 %v1988, %v2139
      %v2198 = vadd.f32 %v1989, %v2144
      %v2199 = vadd.f32 %v1990, %v2147
      %v2200 = vadd.f32 %v1991, %v2152
      %v2201 = vadd.f32 %v1992, %v2155
      %v2202 = vadd.f32 %v1993, %v2160
      %v2203 = vadd.f32 %v1994, %v2163
      %v2204 = vadd.f32 %v1995, %v2168
      %v2205 = vadd.f32 %v1996, %v2171
      %v2206 = vpack.c.bf16 %v584, %v583
      %s2207 = scalar_lea.vmem %s269, 6
      %v2208 = vld [vmem:[%s2207] sm:$0x1]
      %v2210 = vsel %vm782, %v2206, 0
      %v2213 = vsel %vm831, %v2208, 0
      %2215 = vmatprep.subr.bf16.mxu0 0
      %2216 = vmatpush1.bf16.msra.mxu0 0
      %2217 = vmatprep.subr.bf16.mxu0 0
      %2218 = vmatpush1.bf16.msra.mxu0 0
      %2219 = vmatprep.subr.bf16.mxu0 0
      %2220 = vmatpush1.bf16.msra.mxu0 0
      %2221 = vmatprep.subr.bf16.mxu0 0
      %2222 = vmatpush1.bf16.msra.mxu0 0
      %2223 = vmatprep.subr.bf16.mxu0 0
      %2224 = vmatpush1.bf16.msra.mxu0 0
      %2225 = vmatprep.subr.bf16.mxu0 0
      %2226 = vmatpush1.bf16.msra.mxu0 0
      %2227 = vmatprep.subr.bf16.mxu0 0
      %2228 = vmatpush1.bf16.msra.mxu0 0
      %2229 = vmatprep.subr.bf16.mxu0 0
      %2230 = vmatpush1.bf16.msra.mxu0 %v2213
      %2231 = vmatprep.subr.bf16.mxu0 0
      %2232 = vmatpush2.bf16.msra.mxu0 0
      %2233 = vmatprep.subr.bf16.mxu0 0
      %2234 = vmatpush2.bf16.msra.mxu0 0
      %2235 = vmatprep.subr.bf16.mxu0 0
      %2236 = vmatpush2.bf16.msra.mxu0 0
      %2237 = vmatprep.subr.bf16.mxu0 0
      %2238 = vmatpush2.bf16.msra.mxu0 0
      %2239 = vmatprep.subr.bf16.mxu0 0
      %2240 = vmatpush2.bf16.msra.mxu0 0
      %2241 = vmatprep.subr.bf16.mxu0 0
      %2242 = vmatpush2.bf16.msra.mxu0 0
      %2243 = vmatprep.subr.bf16.mxu0 0
      %2244 = vmatpush2.bf16.msra.mxu0 0
      %2245 = vmatprep.subr.bf16.mxu0 0
      %2246 = vmatpush2.bf16.msra.mxu0 0
      %2247 = vmatprep.mubr.bf16.mxu0 0
      %2248 = vmatmul.mubr.bf16.gmra.mxu0 %v1003
      %v2249 = vpop.f32.mrf.mxu0
      %v2250 = vadd.f32 0.0, %v2249
      %v2251 = vpop.f32.mrf.mxu0
      %v2252 = vpop.f32.mrf.mxu0
      %v2253 = vadd.f32 0.0, %v2252
      %v2254 = vpop.f32.mrf.mxu0
      %2255 = vmatprep.mubr.bf16.mxu0 0
      %2256 = vmatmul.mubr.bf16.gmra.mxu0 %v1006
      %v2257 = vpop.f32.mrf.mxu0
      %v2258 = vadd.f32 0.0, %v2257
      %v2259 = vpop.f32.mrf.mxu0
      %v2260 = vpop.f32.mrf.mxu0
      %v2261 = vadd.f32 0.0, %v2260
      %v2262 = vpop.f32.mrf.mxu0
      %2263 = vmatprep.mubr.bf16.mxu0 0
      %2264 = vmatmul.mubr.bf16.gmra.mxu0 %v1009
      %v2265 = vpop.f32.mrf.mxu0
      %v2266 = vadd.f32 0.0, %v2265
      %v2267 = vpop.f32.mrf.mxu0
      %v2268 = vpop.f32.mrf.mxu0
      %v2269 = vadd.f32 0.0, %v2268
      %v2270 = vpop.f32.mrf.mxu0
      %2271 = vmatprep.mubr.bf16.mxu0 0
      %2272 = vmatmul.mubr.bf16.gmra.mxu0 %v1012
      %v2273 = vpop.f32.mrf.mxu0
      %v2274 = vadd.f32 0.0, %v2273
      %v2275 = vpop.f32.mrf.mxu0
      %v2276 = vpop.f32.mrf.mxu0
      %v2277 = vadd.f32 0.0, %v2276
      %v2278 = vpop.f32.mrf.mxu0
      %2279 = vmatprep.mubr.bf16.mxu0 0
      %2280 = vmatmul.mubr.bf16.gmra.mxu0 %v1015
      %v2281 = vpop.f32.mrf.mxu0
      %v2282 = vadd.f32 0.0, %v2281
      %v2283 = vpop.f32.mrf.mxu0
      %v2284 = vpop.f32.mrf.mxu0
      %v2285 = vadd.f32 0.0, %v2284
      %v2286 = vpop.f32.mrf.mxu0
      %2287 = vmatprep.mubr.bf16.mxu0 0
      %2288 = vmatmul.mubr.bf16.gmra.mxu0 %v1018
      %v2289 = vpop.f32.mrf.mxu0
      %v2290 = vadd.f32 0.0, %v2289
      %v2291 = vpop.f32.mrf.mxu0
      %v2292 = vpop.f32.mrf.mxu0
      %v2293 = vadd.f32 0.0, %v2292
      %v2294 = vpop.f32.mrf.mxu0
      %2295 = vmatprep.mubr.bf16.mxu0 0
      %2296 = vmatmul.mubr.bf16.gmra.mxu0 %v1021
      %v2297 = vpop.f32.mrf.mxu0
      %v2298 = vadd.f32 0.0, %v2297
      %v2299 = vpop.f32.mrf.mxu0
      %v2300 = vpop.f32.mrf.mxu0
      %v2301 = vadd.f32 0.0, %v2300
      %v2302 = vpop.f32.mrf.mxu0
      %2303 = vmatprep.mubr.bf16.mxu0 0
      %2304 = vmatmul.mubr.bf16.gmra.mxu0 %v1024
      %v2305 = vpop.f32.mrf.mxu0
      %v2306 = vadd.f32 0.0, %v2305
      %v2307 = vpop.f32.mrf.mxu0
      %v2308 = vpop.f32.mrf.mxu0
      %v2309 = vadd.f32 0.0, %v2308
      %v2310 = vpop.f32.mrf.mxu0
      %2311 = vmatprep.mubr.bf16.mxu0 0
      %2312 = vmatmul.mubr.bf16.gmra.mxu0 %v1027
      %v2313 = vpop.f32.mrf.mxu0
      %v2314 = vadd.f32 0.0, %v2313
      %v2315 = vpop.f32.mrf.mxu0
      %v2316 = vpop.f32.mrf.mxu0
      %v2317 = vadd.f32 0.0, %v2316
      %v2318 = vpop.f32.mrf.mxu0
      %2319 = vmatprep.mubr.bf16.mxu0 0
      %2320 = vmatmul.mubr.bf16.gmra.mxu0 %v1030
      %v2321 = vpop.f32.mrf.mxu0
      %v2322 = vadd.f32 0.0, %v2321
      %v2323 = vpop.f32.mrf.mxu0
      %v2324 = vpop.f32.mrf.mxu0
      %v2325 = vadd.f32 0.0, %v2324
      %v2326 = vpop.f32.mrf.mxu0
      %2327 = vmatprep.mubr.bf16.mxu0 0
      %2328 = vmatmul.mubr.bf16.gmra.mxu0 %v1033
      %v2329 = vpop.f32.mrf.mxu0
      %v2330 = vadd.f32 0.0, %v2329
      %v2331 = vpop.f32.mrf.mxu0
      %v2332 = vpop.f32.mrf.mxu0
      %v2333 = vadd.f32 0.0, %v2332
      %v2334 = vpop.f32.mrf.mxu0
      %2335 = vmatprep.mubr.bf16.mxu0 0
      %2336 = vmatmul.mubr.bf16.gmra.mxu0 %v1036
      %v2337 = vpop.f32.mrf.mxu0
      %v2338 = vadd.f32 0.0, %v2337
      %v2339 = vpop.f32.mrf.mxu0
      %v2340 = vpop.f32.mrf.mxu0
      %v2341 = vadd.f32 0.0, %v2340
      %v2342 = vpop.f32.mrf.mxu0
      %2343 = vmatprep.mubr.bf16.mxu0 0
      %2344 = vmatmul.mubr.bf16.gmra.mxu0 %v1039
      %v2345 = vpop.f32.mrf.mxu0
      %v2346 = vadd.f32 0.0, %v2345
      %v2347 = vpop.f32.mrf.mxu0
      %v2348 = vpop.f32.mrf.mxu0
      %v2349 = vadd.f32 0.0, %v2348
      %v2350 = vpop.f32.mrf.mxu0
      %2351 = vmatprep.mubr.bf16.mxu0 0
      %2352 = vmatmul.mubr.bf16.gmra.mxu0 %v1042
      %v2353 = vpop.f32.mrf.mxu0
      %v2354 = vadd.f32 0.0, %v2353
      %v2355 = vpop.f32.mrf.mxu0
      %v2356 = vpop.f32.mrf.mxu0
      %v2357 = vadd.f32 0.0, %v2356
      %v2358 = vpop.f32.mrf.mxu0
      %2359 = vmatprep.mubr.bf16.mxu0 0
      %2360 = vmatmul.mubr.bf16.gmra.mxu0 %v1587
      %v2361 = vpop.f32.mrf.mxu0
      %v2362 = vadd.f32 0.0, %v2361
      %v2363 = vpop.f32.mrf.mxu0
      %v2364 = vpop.f32.mrf.mxu0
      %v2365 = vadd.f32 0.0, %v2364
      %v2366 = vpop.f32.mrf.mxu0
      %2367 = vmatprep.mubr.bf16.mxu0 0
      %2368 = vmatmul.mubr.bf16.gmra.mxu0 %v2210
      %v2369 = vpop.f32.mrf.mxu0
      %v2370 = vadd.f32 0.0, %v2369
      %v2371 = vpop.f32.mrf.mxu0
      %v2372 = vpop.f32.mrf.mxu0
      %v2373 = vadd.f32 0.0, %v2372
      %v2374 = vpop.f32.mrf.mxu0
      %2375 = vdwg.mxu0
      %v2376 = vadd.f32 %v2174, %v2250
      %v2377 = vadd.f32 %v2175, %v2253
      %v2378 = vadd.f32 %v2176, %v2258
      %v2379 = vadd.f32 %v2177, %v2261
      %v2380 = vadd.f32 %v2178, %v2266
      %v2381 = vadd.f32 %v2179, %v2269
      %v2382 = vadd.f32 %v2180, %v2274
      %v2383 = vadd.f32 %v2181, %v2277
      %v2384 = vadd.f32 %v2182, %v2282
      %v2385 = vadd.f32 %v2183, %v2285
      %v2386 = vadd.f32 %v2184, %v2290
      %v2387 = vadd.f32 %v2185, %v2293
      %v2388 = vadd.f32 %v2186, %v2298
      %v2389 = vadd.f32 %v2187, %v2301
      %v2390 = vadd.f32 %v2188, %v2306
      %v2391 = vadd.f32 %v2189, %v2309
      %v2392 = vadd.f32 %v2190, %v2314
      %v2393 = vadd.f32 %v2191, %v2317
      %v2394 = vadd.f32 %v2192, %v2322
      %v2395 = vadd.f32 %v2193, %v2325
      %v2396 = vadd.f32 %v2194, %v2330
      %v2397 = vadd.f32 %v2195, %v2333
      %v2398 = vadd.f32 %v2196, %v2338
      %v2399 = vadd.f32 %v2197, %v2341
      %v2400 = vadd.f32 %v2198, %v2346
      %v2401 = vadd.f32 %v2199, %v2349
      %v2402 = vadd.f32 %v2200, %v2354
      %v2403 = vadd.f32 %v2201, %v2357
      %v2404 = vadd.f32 %v2202, %v2362
      %v2405 = vadd.f32 %v2203, %v2365
      %v2406 = vadd.f32 %v2204, %v2370
      %v2407 = vadd.f32 %v2205, %v2373
      %v2411 = vrot.slane %v583, 1
      %v2412 = vrot.slane %v584, 1
      %v2413 = vsel %vm651, %v2411, %v2412
      %v2414 = vrot.slane %v585, 1
      %v2415 = vsel %vm651, %v2412, %v2414
      %v2418 = vpack.c.bf16 %v2415, %v2413
      %s2419 = scalar_lea.vmem %s269, 7
      %v2420 = vld [vmem:[%s2419] sm:$0x1]
      %v2422 = vsel %vm782, %v2418, 0
      %v2425 = vsel %vm831, %v2420, 0
      %2427 = vmatprep.subr.bf16.mxu0 0
      %2428 = vmatpush1.bf16.msra.mxu0 0
      %2429 = vmatprep.subr.bf16.mxu0 0
      %2430 = vmatpush1.bf16.msra.mxu0 0
      %2431 = vmatprep.subr.bf16.mxu0 0
      %2432 = vmatpush1.bf16.msra.mxu0 0
      %2433 = vmatprep.subr.bf16.mxu0 0
      %2434 = vmatpush1.bf16.msra.mxu0 0
      %2435 = vmatprep.subr.bf16.mxu0 0
      %2436 = vmatpush1.bf16.msra.mxu0 0
      %2437 = vmatprep.subr.bf16.mxu0 0
      %2438 = vmatpush1.bf16.msra.mxu0 0
      %2439 = vmatprep.subr.bf16.mxu0 0
      %2440 = vmatpush1.bf16.msra.mxu0 0
      %2441 = vmatprep.subr.bf16.mxu0 0
      %2442 = vmatpush1.bf16.msra.mxu0 %v2425
      %2443 = vmatprep.subr.bf16.mxu0 0
      %2444 = vmatpush2.bf16.msra.mxu0 0
      %2445 = vmatprep.subr.bf16.mxu0 0
      %2446 = vmatpush2.bf16.msra.mxu0 0
      %2447 = vmatprep.subr.bf16.mxu0 0
      %2448 = vmatpush2.bf16.msra.mxu0 0
      %2449 = vmatprep.subr.bf16.mxu0 0
      %2450 = vmatpush2.bf16.msra.mxu0 0
      %2451 = vmatprep.subr.bf16.mxu0 0
      %2452 = vmatpush2.bf16.msra.mxu0 0
      %2453 = vmatprep.subr.bf16.mxu0 0
      %2454 = vmatpush2.bf16.msra.mxu0 0
      %2455 = vmatprep.subr.bf16.mxu0 0
      %2456 = vmatpush2.bf16.msra.mxu0 0
      %2457 = vmatprep.subr.bf16.mxu0 0
      %2458 = vmatpush2.bf16.msra.mxu0 0
      %2459 = vmatprep.mubr.bf16.mxu0 0
      %2460 = vmatmul.mubr.bf16.gmra.mxu0 %v790
      %v2461 = vpop.f32.mrf.mxu0
      %v2462 = vadd.f32 0.0, %v2461
      %v2463 = vpop.f32.mrf.mxu0
      %v2464 = vpop.f32.mrf.mxu0
      %v2465 = vadd.f32 0.0, %v2464
      %v2466 = vpop.f32.mrf.mxu0
      %2467 = vmatprep.mubr.bf16.mxu0 0
      %2468 = vmatmul.mubr.bf16.gmra.mxu0 %v793
      %v2469 = vpop.f32.mrf.mxu0
      %v2470 = vadd.f32 0.0, %v2469
      %v2471 = vpop.f32.mrf.mxu0
      %v2472 = vpop.f32.mrf.mxu0
      %v2473 = vadd.f32 0.0, %v2472
      %v2474 = vpop.f32.mrf.mxu0
      %2475 = vmatprep.mubr.bf16.mxu0 0
      %2476 = vmatmul.mubr.bf16.gmra.mxu0 %v796
      %v2477 = vpop.f32.mrf.mxu0
      %v2478 = vadd.f32 0.0, %v2477
      %v2479 = vpop.f32.mrf.mxu0
      %v2480 = vpop.f32.mrf.mxu0
      %v2481 = vadd.f32 0.0, %v2480
      %v2482 = vpop.f32.mrf.mxu0
      %2483 = vmatprep.mubr.bf16.mxu0 0
      %2484 = vmatmul.mubr.bf16.gmra.mxu0 %v799
      %v2485 = vpop.f32.mrf.mxu0
      %v2486 = vadd.f32 0.0, %v2485
      %v2487 = vpop.f32.mrf.mxu0
      %v2488 = vpop.f32.mrf.mxu0
      %v2489 = vadd.f32 0.0, %v2488
      %v2490 = vpop.f32.mrf.mxu0
      %2491 = vmatprep.mubr.bf16.mxu0 0
      %2492 = vmatmul.mubr.bf16.gmra.mxu0 %v802
      %v2493 = vpop.f32.mrf.mxu0
      %v2494 = vadd.f32 0.0, %v2493
      %v2495 = vpop.f32.mrf.mxu0
      %v2496 = vpop.f32.mrf.mxu0
      %v2497 = vadd.f32 0.0, %v2496
      %v2498 = vpop.f32.mrf.mxu0
      %2499 = vmatprep.mubr.bf16.mxu0 0
      %2500 = vmatmul.mubr.bf16.gmra.mxu0 %v805
      %v2501 = vpop.f32.mrf.mxu0
      %v2502 = vadd.f32 0.0, %v2501
      %v2503 = vpop.f32.mrf.mxu0
      %v2504 = vpop.f32.mrf.mxu0
      %v2505 = vadd.f32 0.0, %v2504
      %v2506 = vpop.f32.mrf.mxu0
      %2507 = vmatprep.mubr.bf16.mxu0 0
      %2508 = vmatmul.mubr.bf16.gmra.mxu0 %v808
      %v2509 = vpop.f32.mrf.mxu0
      %v2510 = vadd.f32 0.0, %v2509
      %v2511 = vpop.f32.mrf.mxu0
      %v2512 = vpop.f32.mrf.mxu0
      %v2513 = vadd.f32 0.0, %v2512
      %v2514 = vpop.f32.mrf.mxu0
      %2515 = vmatprep.mubr.bf16.mxu0 0
      %2516 = vmatmul.mubr.bf16.gmra.mxu0 %v811
      %v2517 = vpop.f32.mrf.mxu0
      %v2518 = vadd.f32 0.0, %v2517
      %v2519 = vpop.f32.mrf.mxu0
      %v2520 = vpop.f32.mrf.mxu0
      %v2521 = vadd.f32 0.0, %v2520
      %v2522 = vpop.f32.mrf.mxu0
      %2523 = vmatprep.mubr.bf16.mxu0 0
      %2524 = vmatmul.mubr.bf16.gmra.mxu0 %v814
      %v2525 = vpop.f32.mrf.mxu0
      %v2526 = vadd.f32 0.0, %v2525
      %v2527 = vpop.f32.mrf.mxu0
      %v2528 = vpop.f32.mrf.mxu0
      %v2529 = vadd.f32 0.0, %v2528
      %v2530 = vpop.f32.mrf.mxu0
      %2531 = vmatprep.mubr.bf16.mxu0 0
      %2532 = vmatmul.mubr.bf16.gmra.mxu0 %v817
      %v2533 = vpop.f32.mrf.mxu0
      %v2534 = vadd.f32 0.0, %v2533
      %v2535 = vpop.f32.mrf.mxu0
      %v2536 = vpop.f32.mrf.mxu0
      %v2537 = vadd.f32 0.0, %v2536
      %v2538 = vpop.f32.mrf.mxu0
      %2539 = vmatprep.mubr.bf16.mxu0 0
      %2540 = vmatmul.mubr.bf16.gmra.mxu0 %v820
      %v2541 = vpop.f32.mrf.mxu0
      %v2542 = vadd.f32 0.0, %v2541
      %v2543 = vpop.f32.mrf.mxu0
      %v2544 = vpop.f32.mrf.mxu0
      %v2545 = vadd.f32 0.0, %v2544
      %v2546 = vpop.f32.mrf.mxu0
      %2547 = vmatprep.mubr.bf16.mxu0 0
      %2548 = vmatmul.mubr.bf16.gmra.mxu0 %v823
      %v2549 = vpop.f32.mrf.mxu0
      %v2550 = vadd.f32 0.0, %v2549
      %v2551 = vpop.f32.mrf.mxu0
      %v2552 = vpop.f32.mrf.mxu0
      %v2553 = vadd.f32 0.0, %v2552
      %v2554 = vpop.f32.mrf.mxu0
      %2555 = vmatprep.mubr.bf16.mxu0 0
      %2556 = vmatmul.mubr.bf16.gmra.mxu0 %v826
      %v2557 = vpop.f32.mrf.mxu0
      %v2558 = vadd.f32 0.0, %v2557
      %v2559 = vpop.f32.mrf.mxu0
      %v2560 = vpop.f32.mrf.mxu0
      %v2561 = vadd.f32 0.0, %v2560
      %v2562 = vpop.f32.mrf.mxu0
      %2563 = vmatprep.mubr.bf16.mxu0 0
      %2564 = vmatmul.mubr.bf16.gmra.mxu0 %v829
      %v2565 = vpop.f32.mrf.mxu0
      %v2566 = vadd.f32 0.0, %v2565
      %v2567 = vpop.f32.mrf.mxu0
      %v2568 = vpop.f32.mrf.mxu0
      %v2569 = vadd.f32 0.0, %v2568
      %v2570 = vpop.f32.mrf.mxu0
      %2571 = vmatprep.mubr.bf16.mxu0 0
      %2572 = vmatmul.mubr.bf16.gmra.mxu0 %v1799
      %v2573 = vpop.f32.mrf.mxu0
      %v2574 = vadd.f32 0.0, %v2573
      %v2575 = vpop.f32.mrf.mxu0
      %v2576 = vpop.f32.mrf.mxu0
      %v2577 = vadd.f32 0.0, %v2576
      %v2578 = vpop.f32.mrf.mxu0
      %2579 = vmatprep.mubr.bf16.mxu0 0
      %2580 = vmatmul.mubr.bf16.gmra.mxu0 %v2422
      %v2581 = vpop.f32.mrf.mxu0
      %v2582 = vadd.f32 0.0, %v2581
      %v2583 = vpop.f32.mrf.mxu0
      %v2584 = vpop.f32.mrf.mxu0
      %v2585 = vadd.f32 0.0, %v2584
      %v2586 = vpop.f32.mrf.mxu0
      %2587 = vdwg.mxu0
      %v2588 = vadd.f32 %v2376, %v2462
      %v2589 = vadd.f32 %v2377, %v2465
      %v2590 = vadd.f32 %v2378, %v2470
      %v2591 = vadd.f32 %v2379, %v2473
      %v2592 = vadd.f32 %v2380, %v2478
      %v2593 = vadd.f32 %v2381, %v2481
      %v2594 = vadd.f32 %v2382, %v2486
      %v2595 = vadd.f32 %v2383, %v2489
      %v2596 = vadd.f32 %v2384, %v2494
      %v2597 = vadd.f32 %v2385, %v2497
      %v2598 = vadd.f32 %v2386, %v2502
      %v2599 = vadd.f32 %v2387, %v2505
      %v2600 = vadd.f32 %v2388, %v2510
      %v2601 = vadd.f32 %v2389, %v2513
      %v2602 = vadd.f32 %v2390, %v2518
      %v2603 = vadd.f32 %v2391, %v2521
      %v2604 = vadd.f32 %v2392, %v2526
      %v2605 = vadd.f32 %v2393, %v2529
      %v2606 = vadd.f32 %v2394, %v2534
      %v2607 = vadd.f32 %v2395, %v2537
      %v2608 = vadd.f32 %v2396, %v2542
      %v2609 = vadd.f32 %v2397, %v2545
      %v2610 = vadd.f32 %v2398, %v2550
      %v2611 = vadd.f32 %v2399, %v2553
      %v2612 = vadd.f32 %v2400, %v2558
      %v2613 = vadd.f32 %v2401, %v2561
      %v2614 = vadd.f32 %v2402, %v2566
      %v2615 = vadd.f32 %v2403, %v2569
      %v2616 = vadd.f32 %v2404, %v2574
      %v2617 = vadd.f32 %v2405, %v2577
      %v2618 = vadd.f32 %v2406, %v2582
      %v2619 = vadd.f32 %v2407, %v2585
      %v2620 = vrot.slane %v583, 2
      %v2621 = vrot.slane %v584, 2
      %v2622 = vsel %vm1208, %v2620, %v2621
      %v2623 = vrot.slane %v585, 2
      %v2624 = vsel %vm1208, %v2621, %v2623
      %v2627 = vpack.c.bf16 %v2624, %v2622
      %s2628 = scalar_lea.vmem %s269, 8
      %v2629 = vld [vmem:[%s2628] sm:$0x1]
      %v2631 = vsel %vm782, %v2627, 0
      %v2634 = vsel %vm831, %v2629, 0
      %2636 = vmatprep.subr.bf16.mxu0 0
      %2637 = vmatpush1.bf16.msra.mxu0 0
      %2638 = vmatprep.subr.bf16.mxu0 0
      %2639 = vmatpush1.bf16.msra.mxu0 0
      %2640 = vmatprep.subr.bf16.mxu0 0
      %2641 = vmatpush1.bf16.msra.mxu0 0
      %2642 = vmatprep.subr.bf16.mxu0 0
      %2643 = vmatpush1.bf16.msra.mxu0 0
      %2644 = vmatprep.subr.bf16.mxu0 0
      %2645 = vmatpush1.bf16.msra.mxu0 0
      %2646 = vmatprep.subr.bf16.mxu0 0
      %2647 = vmatpush1.bf16.msra.mxu0 0
      %2648 = vmatprep.subr.bf16.mxu0 0
      %2649 = vmatpush1.bf16.msra.mxu0 0
      %2650 = vmatprep.subr.bf16.mxu0 0
      %2651 = vmatpush1.bf16.msra.mxu0 %v2634
      %2652 = vmatprep.subr.bf16.mxu0 0
      %2653 = vmatpush2.bf16.msra.mxu0 0
      %2654 = vmatprep.subr.bf16.mxu0 0
      %2655 = vmatpush2.bf16.msra.mxu0 0
      %2656 = vmatprep.subr.bf16.mxu0 0
      %2657 = vmatpush2.bf16.msra.mxu0 0
      %2658 = vmatprep.subr.bf16.mxu0 0
      %2659 = vmatpush2.bf16.msra.mxu0 0
      %2660 = vmatprep.subr.bf16.mxu0 0
      %2661 = vmatpush2.bf16.msra.mxu0 0
      %2662 = vmatprep.subr.bf16.mxu0 0
      %2663 = vmatpush2.bf16.msra.mxu0 0
      %2664 = vmatprep.subr.bf16.mxu0 0
      %2665 = vmatpush2.bf16.msra.mxu0 0
      %2666 = vmatprep.subr.bf16.mxu0 0
      %2667 = vmatpush2.bf16.msra.mxu0 0
      %2668 = vmatprep.mubr.bf16.mxu0 0
      %2669 = vmatmul.mubr.bf16.gmra.mxu0 %v1346
      %v2670 = vpop.f32.mrf.mxu0
      %v2671 = vadd.f32 0.0, %v2670
      %v2672 = vpop.f32.mrf.mxu0
      %v2673 = vpop.f32.mrf.mxu0
      %v2674 = vadd.f32 0.0, %v2673
      %v2675 = vpop.f32.mrf.mxu0
      %2676 = vmatprep.mubr.bf16.mxu0 0
      %2677 = vmatmul.mubr.bf16.gmra.mxu0 %v1349
      %v2678 = vpop.f32.mrf.mxu0
      %v2679 = vadd.f32 0.0, %v2678
      %v2680 = vpop.f32.mrf.mxu0
      %v2681 = vpop.f32.mrf.mxu0
      %v2682 = vadd.f32 0.0, %v2681
      %v2683 = vpop.f32.mrf.mxu0
      %2684 = vmatprep.mubr.bf16.mxu0 0
      %2685 = vmatmul.mubr.bf16.gmra.mxu0 %v1352
      %v2686 = vpop.f32.mrf.mxu0
      %v2687 = vadd.f32 0.0, %v2686
      %v2688 = vpop.f32.mrf.mxu0
      %v2689 = vpop.f32.mrf.mxu0
      %v2690 = vadd.f32 0.0, %v2689
      %v2691 = vpop.f32.mrf.mxu0
      %2692 = vmatprep.mubr.bf16.mxu0 0
      %2693 = vmatmul.mubr.bf16.gmra.mxu0 %v1355
      %v2694 = vpop.f32.mrf.mxu0
      %v2695 = vadd.f32 0.0, %v2694
      %v2696 = vpop.f32.mrf.mxu0
      %v2697 = vpop.f32.mrf.mxu0
      %v2698 = vadd.f32 0.0, %v2697
      %v2699 = vpop.f32.mrf.mxu0
      %2700 = vmatprep.mubr.bf16.mxu0 0
      %2701 = vmatmul.mubr.bf16.gmra.mxu0 %v1358
      %v2702 = vpop.f32.mrf.mxu0
      %v2703 = vadd.f32 0.0, %v2702
      %v2704 = vpop.f32.mrf.mxu0
      %v2705 = vpop.f32.mrf.mxu0
      %v2706 = vadd.f32 0.0, %v2705
      %v2707 = vpop.f32.mrf.mxu0
      %2708 = vmatprep.mubr.bf16.mxu0 0
      %2709 = vmatmul.mubr.bf16.gmra.mxu0 %v1361
      %v2710 = vpop.f32.mrf.mxu0
      %v2711 = vadd.f32 0.0, %v2710
      %v2712 = vpop.f32.mrf.mxu0
      %v2713 = vpop.f32.mrf.mxu0
      %v2714 = vadd.f32 0.0, %v2713
      %v2715 = vpop.f32.mrf.mxu0
      %2716 = vmatprep.mubr.bf16.mxu0 0
      %2717 = vmatmul.mubr.bf16.gmra.mxu0 %v1364
      %v2718 = vpop.f32.mrf.mxu0
      %v2719 = vadd.f32 0.0, %v2718
      %v2720 = vpop.f32.mrf.mxu0
      %v2721 = vpop.f32.mrf.mxu0
      %v2722 = vadd.f32 0.0, %v2721
      %v2723 = vpop.f32.mrf.mxu0
      %2724 = vmatprep.mubr.bf16.mxu0 0
      %2725 = vmatmul.mubr.bf16.gmra.mxu0 %v1367
      %v2726 = vpop.f32.mrf.mxu0
      %v2727 = vadd.f32 0.0, %v2726
      %v2728 = vpop.f32.mrf.mxu0
      %v2729 = vpop.f32.mrf.mxu0
      %v2730 = vadd.f32 0.0, %v2729
      %v2731 = vpop.f32.mrf.mxu0
      %2732 = vmatprep.mubr.bf16.mxu0 0
      %2733 = vmatmul.mubr.bf16.gmra.mxu0 %v1370
      %v2734 = vpop.f32.mrf.mxu0
      %v2735 = vadd.f32 0.0, %v2734
      %v2736 = vpop.f32.mrf.mxu0
      %v2737 = vpop.f32.mrf.mxu0
      %v2738 = vadd.f32 0.0, %v2737
      %v2739 = vpop.f32.mrf.mxu0
      %2740 = vmatprep.mubr.bf16.mxu0 0
      %2741 = vmatmul.mubr.bf16.gmra.mxu0 %v1373
      %v2742 = vpop.f32.mrf.mxu0
      %v2743 = vadd.f32 0.0, %v2742
      %v2744 = vpop.f32.mrf.mxu0
      %v2745 = vpop.f32.mrf.mxu0
      %v2746 = vadd.f32 0.0, %v2745
      %v2747 = vpop.f32.mrf.mxu0
      %2748 = vmatprep.mubr.bf16.mxu0 0
      %2749 = vmatmul.mubr.bf16.gmra.mxu0 %v1376
      %v2750 = vpop.f32.mrf.mxu0
      %v2751 = vadd.f32 0.0, %v2750
      %v2752 = vpop.f32.mrf.mxu0
      %v2753 = vpop.f32.mrf.mxu0
      %v2754 = vadd.f32 0.0, %v2753
      %v2755 = vpop.f32.mrf.mxu0
      %2756 = vmatprep.mubr.bf16.mxu0 0
      %2757 = vmatmul.mubr.bf16.gmra.mxu0 %v1379
      %v2758 = vpop.f32.mrf.mxu0
      %v2759 = vadd.f32 0.0, %v2758
      %v2760 = vpop.f32.mrf.mxu0
      %v2761 = vpop.f32.mrf.mxu0
      %v2762 = vadd.f32 0.0, %v2761
      %v2763 = vpop.f32.mrf.mxu0
      %2764 = vmatprep.mubr.bf16.mxu0 0
      %2765 = vmatmul.mubr.bf16.gmra.mxu0 %v1382
      %v2766 = vpop.f32.mrf.mxu0
      %v2767 = vadd.f32 0.0, %v2766
      %v2768 = vpop.f32.mrf.mxu0
      %v2769 = vpop.f32.mrf.mxu0
      %v2770 = vadd.f32 0.0, %v2769
      %v2771 = vpop.f32.mrf.mxu0
      %2772 = vmatprep.mubr.bf16.mxu0 0
      %2773 = vmatmul.mubr.bf16.gmra.mxu0 %v1385
      %v2774 = vpop.f32.mrf.mxu0
      %v2775 = vadd.f32 0.0, %v2774
      %v2776 = vpop.f32.mrf.mxu0
      %v2777 = vpop.f32.mrf.mxu0
      %v2778 = vadd.f32 0.0, %v2777
      %v2779 = vpop.f32.mrf.mxu0
      %2780 = vmatprep.mubr.bf16.mxu0 0
      %2781 = vmatmul.mubr.bf16.gmra.mxu0 %v2008
      %v2782 = vpop.f32.mrf.mxu0
      %v2783 = vadd.f32 0.0, %v2782
      %v2784 = vpop.f32.mrf.mxu0
      %v2785 = vpop.f32.mrf.mxu0
      %v2786 = vadd.f32 0.0, %v2785
      %v2787 = vpop.f32.mrf.mxu0
      %2788 = vmatprep.mubr.bf16.mxu0 0
      %2789 = vmatmul.mubr.bf16.gmra.mxu0 %v2631
      %v2790 = vpop.f32.mrf.mxu0
      %v2791 = vadd.f32 0.0, %v2790
      %v2792 = vpop.f32.mrf.mxu0
      %v2793 = vpop.f32.mrf.mxu0
      %v2794 = vadd.f32 0.0, %v2793
      %v2795 = vpop.f32.mrf.mxu0
      %2796 = vdwg.mxu0
      %v2797 = vadd.f32 %v2588, %v2671
      %v2798 = vadd.f32 %v2589, %v2674
      %v2799 = vadd.f32 %v2590, %v2679
      %v2800 = vadd.f32 %v2591, %v2682
      %v2801 = vadd.f32 %v2592, %v2687
      %v2802 = vadd.f32 %v2593, %v2690
      %v2803 = vadd.f32 %v2594, %v2695
      %v2804 = vadd.f32 %v2595, %v2698
      %v2805 = vadd.f32 %v2596, %v2703
      %v2806 = vadd.f32 %v2597, %v2706
      %v2807 = vadd.f32 %v2598, %v2711
      %v2808 = vadd.f32 %v2599, %v2714
      %v2809 = vadd.f32 %v2600, %v2719
      %v2810 = vadd.f32 %v2601, %v2722
      %v2811 = vadd.f32 %v2602, %v2727
      %v2812 = vadd.f32 %v2603, %v2730
      %v2813 = vadd.f32 %v2604, %v2735
      %v2814 = vadd.f32 %v2605, %v2738
      %v2815 = vadd.f32 %v2606, %v2743
      %v2816 = vadd.f32 %v2607, %v2746
      %v2817 = vadd.f32 %v2608, %v2751
      %v2818 = vadd.f32 %v2609, %v2754
      %v2819 = vadd.f32 %v2610, %v2759
      %v2820 = vadd.f32 %v2611, %v2762
      %v2821 = vadd.f32 %v2612, %v2767
      %v2822 = vadd.f32 %v2613, %v2770
      %v2823 = vadd.f32 %v2614, %v2775
      %v2824 = vadd.f32 %v2615, %v2778
      %v2825 = vadd.f32 %v2616, %v2783
      %v2826 = vadd.f32 %v2617, %v2786
      %v2827 = vadd.f32 %v2618, %v2791
      %v2828 = vadd.f32 %v2619, %v2794
      %vm2829 = vcmask 31744
      %2830 = vst.msk [vmem:[%s278] sm:$0xff] %vm2829, %v2797
      %2831 = vst.msk [vmem:[%s278 + $0x8] sm:$0xff] %vm2829, %v2798
      %2832 = vst.msk [vmem:[%s278 + $0x10] sm:$0xff] %vm2829, %v2799
      %2833 = vst.msk [vmem:[%s278 + $0x18] sm:$0xff] %vm2829, %v2800
      %2834 = vst.msk [vmem:[%s278 + $0x20] sm:$0xff] %vm2829, %v2801
      %2835 = vst.msk [vmem:[%s278 + $0x28] sm:$0xff] %vm2829, %v2802
      %2836 = vst.msk [vmem:[%s278 + $0x30] sm:$0xff] %vm2829, %v2803
      %2837 = vst.msk [vmem:[%s278 + $0x38] sm:$0xff] %vm2829, %v2804
      %2838 = vst.msk [vmem:[%s278 + $0x40] sm:$0xff] %vm2829, %v2805
      %2839 = vst.msk [vmem:[%s278 + $0x48] sm:$0xff] %vm2829, %v2806
      %2840 = vst.msk [vmem:[%s278 + $0x50] sm:$0xff] %vm2829, %v2807
      %2841 = vst.msk [vmem:[%s278 + $0x58] sm:$0xff] %vm2829, %v2808
      %2842 = vst.msk [vmem:[%s278 + $0x60] sm:$0xff] %vm2829, %v2809
      %2843 = vst.msk [vmem:[%s278 + $0x68] sm:$0xff] %vm2829, %v2810
      %2844 = vst.msk [vmem:[%s278 + $0x70] sm:$0xff] %vm2829, %v2811
      %2845 = vst.msk [vmem:[%s278 + $0x78] sm:$0xff] %vm2829, %v2812
      %2846 = vst.msk [vmem:[%s278 + $0x80] sm:$0xff] %vm2829, %v2813
      %2847 = vst.msk [vmem:[%s278 + $0x88] sm:$0xff] %vm2829, %v2814
      %2848 = vst.msk [vmem:[%s278 + $0x90] sm:$0xff] %vm2829, %v2815
      %2849 = vst.msk [vmem:[%s278 + $0x98] sm:$0xff] %vm2829, %v2816
      %2850 = vst.msk [vmem:[%s278 + $0xa0] sm:$0xff] %vm2829, %v2817
      %2851 = vst.msk [vmem:[%s278 + $0xa8] sm:$0xff] %vm2829, %v2818
      %2852 = vst.msk [vmem:[%s278 + $0xb0] sm:$0xff] %vm2829, %v2819
      %2853 = vst.msk [vmem:[%s278 + $0xb8] sm:$0xff] %vm2829, %v2820
      %2854 = vst.msk [vmem:[%s278 + $0xc0] sm:$0xff] %vm2829, %v2821
      %2855 = vst.msk [vmem:[%s278 + $0xc8] sm:$0xff] %vm2829, %v2822
      %2856 = vst.msk [vmem:[%s278 + $0xd0] sm:$0xff] %vm2829, %v2823
      %2857 = vst.msk [vmem:[%s278 + $0xd8] sm:$0xff] %vm2829, %v2824
      %2858 = vst.msk [vmem:[%s278 + $0xe0] sm:$0xff] %vm2829, %v2825
      %2859 = vst.msk [vmem:[%s278 + $0xe8] sm:$0xff] %vm2829, %v2826
      %2860 = vst.msk [vmem:[%s278 + $0xf0] sm:$0xff] %vm2829, %v2827
      %2861 = vst.msk [vmem:[%s278 + $0xf8] sm:$0xff] %vm2829, %v2828
      %p2862 = scmp.lt.s32.totalorder %s19, 1
      %s2863 = scalar_select %p2862, %s19, 1
      %p2864 = scmp.lt.s32.totalorder %s20, 1
      %s2865 = scalar_select %p2864, %s20, 1
      %s2866 = smul.addr %s2865, 32
      %s2867 = smul.addr %s2863, 64
      %s2868 = sadd.s32 %s2866, %s2867
      %s2869 = smul.addr %s2868, 8
      %s2870 = scalar_lea.vmem %s4, %s2869
      // Predicated region
      $region37: #{bn_act_conv2d.1} parent=35 // pred_check
        %p2871 = pneg %p153
      $region38: #{bn_act_conv2d.1} parent=35 // pred_check_branch
        %2873 = sbr.rel (%p2871) target = $region40
      $region39: #{bn_act_conv2d.1} parent=35 // pred_region
        _
      $region40: #{bn_act_conv2d.1} parent=35 // pred_fallthru
        _
    $region36: #{bn_act_conv2d.1} parent=5 // pred_fallthru
      _
    %p2874 = scmp.le.s32.totalorder 2, %s10
    // Predicated region
    $region41: #{bn_act_conv2d.1} parent=5 // pred_check
      %p2875 = pneg %p2874
    $region42: #{bn_act_conv2d.1} parent=5 // pred_check_branch
      %2877 = sbr.rel (%p2875) target = $region44
    $region43: #{bn_act_conv2d.1} parent=5 // pred_region
      %s2878 = ssub.s32 %s10, 2
      // Predicated region
      $region45: #{bn_act_conv2d.1} parent=43 // pred_check
        %p2879 = pneg %p159
      $region46: #{bn_act_conv2d.1} parent=43 // pred_check_branch
        %2881 = sbr.rel (%p2879) target = $region48
      $region47: #{bn_act_conv2d.1} parent=43 // pred_region
        %p2882 = scmp.lt.s32.totalorder %s21, 1
        %s2883 = scalar_select %p2882, %s21, 1
        %p2884 = scmp.lt.s32.totalorder %s22, 1
        %s2885 = scalar_select %p2884, %s22, 1
        %s2886 = smul.addr %s2885, 32
        %s2887 = smul.addr %s2883, 64
        %s2888 = sadd.s32 %s2886, %s2887
        %s2889 = smul.addr %s2888, 8
        %s2890 = scalar_lea.vmem %s4, %s2889
      $region48: #{bn_act_conv2d.1} parent=43 // pred_fallthru
        _
    $region44: #{bn_act_conv2d.1} parent=5 // pred_fallthru
      _
  $region6: #{bn_act_conv2d.1} parent=0 // loop_footer
    %s14 = sadd.s32 1, %s10
  $region7: #{bn_act_conv2d.1} parent=0 // loop_footer_branch
    %9 = sbr.rel target = $region3
  $region8: #{bn_act_conv2d.1} parent=0 // loop_exit
    _

</llo_original>
